<compile_context>
chip_gen: v5e
topology: v5e:2x2
jax: 0.10.0
libtpu: 0.0.40
codegen_flags: <defaults>
</compile_context>

<pallas_src>
import jax
import jax.numpy as jnp
from jax.experimental import pallas as pl
from jax.experimental.pallas import tpu as pltpu

# Small, self-consistent versions of the module's globals.
INPUT_SHAPE = 8
INPUT_SIZE = INPUT_SHAPE * INPUT_SHAPE       # 64
HIDDEN_SIZE = 32
NUM_LAYERS = 3
TRAIN_SEQ_LENGTH = 9                         # seq len used = TRAIN_SEQ_LENGTH - 1 = 8
BATCH = 2
B_PAD = 8                                    # pad batch to fill f32 sublanes
DROPOUT_P = 0.1

# Packed-weights layout (per layer, all offsets 8-aligned):
#   rows [ 0, 64)  : W_ih^T   (zero-padded to 64 rows for layers > 0)
#   rows [64, 96)  : W_hh^T   (32 rows)
#   rows [96,104)  : bias     (row 96 holds b_ih + b_hh, rest zero)
ROWS_PER_LAYER = 64 + HIDDEN_SIZE + 8        # 104


def _make_encoder_kernel(num_layers, T, B, H, D_in):
    """Builds the fused encoder kernel for fixed (num_layers, T, B_pad, H, D_in)."""
    G = 4 * H                                 # 128 gate lanes

    def kernel(x_ref, w_ref, hc_ref, zx_ref, seq_ref):
        # Hoisted gate-lane constants (i/f/o lanes use the tanh->sigmoid
        # identity; g lanes are plain tanh). Broadcast once, reused T*L times.
        lane = jax.lax.broadcasted_iota(jnp.int32, (B, G), 1)
        is_g = jnp.logical_and(lane >= 2 * H, lane < 3 * H)
        gate_scale = jnp.where(is_g, 1.0, 0.5).astype(jnp.float32)   # pre & post mul
        gate_bias = jnp.where(is_g, 0.0, 0.5).astype(jnp.float32)    # post add

        for layer in range(num_layers):
            base = layer * ROWS_PER_LAYER
            d_in = D_in if layer == 0 else H

            w_ih = w_ref[base:base + d_in, :].astype(jnp.bfloat16)          # (d_in, 4H)
            w_hh = w_ref[base + 64:base + 64 + H, :].astype(jnp.bfloat16)   # (H, 4H)
            b = w_ref[base + 96:base + 97, :]                               # (1, 4H)

            # Layer input sequence, time-major flattened (row = t*B + b).
            if layer == 0:
                xs = x_ref[...]                                             # (T*B, D_in)
            else:
                xs = seq_ref[...]                                           # (T*B, H)

            # Hoisted, non-recurrent input projection for ALL timesteps at
            # once; parked in VMEM scratch so per-step access is a vld.
            zx_ref[...] = jnp.dot(xs.astype(jnp.bfloat16), w_ih,
                                  preferred_element_type=jnp.float32) + b   # (T*B, 4H)

            h = jnp.zeros((B, H), jnp.float32)
            c = jnp.zeros((B, H), jnp.float32)
            for t in range(T):                                              # static unroll
                z = zx_ref[t * B:(t + 1) * B, :] + jnp.dot(
                    h.astype(jnp.bfloat16), w_hh,
                    preferred_element_type=jnp.float32)                     # (B, 4H)
                # Single full-width tanh; recover sigmoids via a*t + b.
                u = jnp.tanh(z * gate_scale)
                r = u * gate_scale + gate_bias
                i = r[:, 0 * H:1 * H]
                f = r[:, 1 * H:2 * H]
                g = r[:, 2 * H:3 * H]
                o = r[:, 3 * H:4 * H]
                c = f * c + i * g
                h = o * jnp.tanh(c)
                if layer < num_layers - 1:
                    # Inter-layer sequence stays on-chip: aligned (8, H) store.
                    seq_ref[t * B:(t + 1) * B, :] = h

            # Final-state stores only (forward() discards the output sequence).
            hc_ref[0, layer, :, :] = h
            hc_ref[1, layer, :, :] = c

            # TODO(synk): nn.LSTM inter-layer dropout(p) applies in train mode
            # only; eval-mode semantics (no dropout) implemented here.

    return kernel


def init_lstm_params(key, input_size, hidden_size, num_layers):
    """PyTorch-style uniform(-1/sqrt(H), 1/sqrt(H)) init; deterministic."""
    k = 1.0 / (hidden_size ** 0.5)
    params = []
    for layer in range(num_layers):
        d_in = input_size if layer == 0 else hidden_size
        key, k1, k2, k3, k4 = jax.random.split(key, 5)
        # PyTorch stores W_ih: (4H, D), W_hh: (4H, H). Pre-transpose for the
        # kernel's right-multiplication and fuse the two bias vectors.
        w_ih = jax.random.uniform(k1, (4 * hidden_size, d_in), jnp.float32, -k, k)
        w_hh = jax.random.uniform(k2, (4 * hidden_size, hidden_size), jnp.float32, -k, k)
        b_ih = jax.random.uniform(k3, (4 * hidden_size,), jnp.float32, -k, k)
        b_hh = jax.random.uniform(k4, (4 * hidden_size,), jnp.float32, -k, k)
        params.append((w_ih.T, w_hh.T, (b_ih + b_hh).reshape(1, 4 * hidden_size)))
    return params


def _pack_params(params, hidden_size):
    """Packs all layer weights/biases into one (L*104, 4H) f32 buffer."""
    L = len(params)
    G = 4 * hidden_size
    packed = jnp.zeros((L * ROWS_PER_LAYER, G), jnp.float32)
    for layer, (w_ih_t, w_hh_t, b) in enumerate(params):
        base = layer * ROWS_PER_LAYER
        d_in = w_ih_t.shape[0]
        packed = packed.at[base:base + d_in, :].set(w_ih_t)
        packed = packed.at[base + 64:base + 64 + hidden_size, :].set(w_hh_t)
        packed = packed.at[base + 96:base + 97, :].set(b)
    return packed


def encoder_forward(x, params):
    """Mirrors Encoder.forward: returns (hidden, cell), each (num_layers, B, H)."""
    B, T, D = x.shape
    assert T == TRAIN_SEQ_LENGTH - 1 and D == INPUT_SIZE, x.shape
    H = HIDDEN_SIZE
    L = len(params)

    # Time-major, batch padded to 8 sublanes, flattened to (T*B_pad, D).
    xs = jnp.transpose(x, (1, 0, 2))                               # (T, B, D)
    xs = jnp.pad(xs, ((0, 0), (0, B_PAD - B), (0, 0)))             # (T, B_pad, D)
    xs = xs.reshape(T * B_PAD, D)

    packed_w = _pack_params(params, H)                             # (L*104, 4H)

    vmem = pl.BlockSpec(memory_space=pltpu.MemorySpace.VMEM)
    hc = pl.pallas_call(
        _make_encoder_kernel(L, T, B_PAD, H, D),
        out_shape=jax.ShapeDtypeStruct((2, L, B_PAD, H), jnp.float32),
        in_specs=[vmem, vmem],
        out_specs=vmem,
        scratch_shapes=[pltpu.VMEM((T * B_PAD, 4 * H), jnp.float32),   # zx
                        pltpu.VMEM((T * B_PAD, H), jnp.float32)],      # inter-layer seq
    )(xs, packed_w)

    hidden = hc[0, :, :B, :]
    cell = hc[1, :, :B, :]
    return hidden, cell


def _encoder_ref(x, params):
    """Pure-JAX reference (same math, incl. bf16 MXU operands), for validation."""
    B = x.shape[0]
    H = HIDDEN_SIZE
    xs = jnp.transpose(x, (1, 0, 2))     # (T, B, D)
    h_fin, c_fin = [], []
    for (w_ih_t, w_hh_t, b) in params:
        h = jnp.zeros((B, H), jnp.float32)
        c = jnp.zeros((B, H), jnp.float32)
        outs = []
        for t in range(xs.shape[0]):
            z = (jnp.dot(xs[t].astype(jnp.bfloat16), w_ih_t.astype(jnp.bfloat16),
                         preferred_element_type=jnp.float32)
                 + jnp.dot(h.astype(jnp.bfloat16), w_hh_t.astype(jnp.bfloat16),
                           preferred_element_type=jnp.float32) + b)
            i = jax.nn.sigmoid(z[:, 0 * H:1 * H])
            f = jax.nn.sigmoid(z[:, 1 * H:2 * H])
            g = jnp.tanh(z[:, 2 * H:3 * H])
            o = jax.nn.sigmoid(z[:, 3 * H:4 * H])
            c = f * c + i * g
            h = o * jnp.tanh(c)
            outs.append(h)
        xs = jnp.stack(outs, axis=0)
        h_fin.append(h)
        c_fin.append(c)
    return jnp.stack(h_fin, axis=0), jnp.stack(c_fin, axis=0)


if __name__ == "__main__":
    key = jax.random.PRNGKey(0)
    key, xk, pk = jax.random.split(key, 3)
    x = jax.random.normal(xk, (BATCH, TRAIN_SEQ_LENGTH - 1, INPUT_SIZE), jnp.float32)
    params = init_lstm_params(pk, INPUT_SIZE, HIDDEN_SIZE, NUM_LAYERS)

    hidden, cell = jax.jit(encoder_forward)(x, params)
    jax.block_until_ready((hidden, cell))

    assert hidden.shape == (NUM_LAYERS, BATCH, HIDDEN_SIZE)
    assert cell.shape == (NUM_LAYERS, BATCH, HIDDEN_SIZE)

    # Validate against a pure-JAX reference using the same bf16 MXU operand
    # casts (f32 accumulation); bounded LSTM activations -> tight tolerance.
    h_ref, c_ref = _encoder_ref(x, params)
    assert jnp.allclose(hidden, h_ref, atol=5e-3, rtol=5e-3)
    assert jnp.allclose(cell, c_ref, atol=5e-3, rtol=5e-3)

    print("KERNEL_OK")
</pallas_src>

<mosaic_0001>
module attributes {stable_mosaic.version = 11 : i64} {
  func.func @kernel(%arg0: memref<64x64xf32, #tpu.memory_space<vmem>>, %arg1: memref<312x128xf32, #tpu.memory_space<vmem>>, %arg2: memref<2x3x8x32xf32, #tpu.memory_space<vmem>>, %arg3: memref<64x128xf32, #tpu.memory_space<vmem>>, %arg4: memref<64x32xf32, #tpu.memory_space<vmem>>) attributes {dimension_semantics = [], scalar_prefetch = 0 : i64, scratch_operands = 2 : i64, tpu.core_type = #tpu.core_type<tc>} {
    %0 = tpu.iota {dimensions = array<i32: 1>} : vector<8x128xi32>
    %c64_i32 = arith.constant 64 : i32
    %1 = vector.broadcast %c64_i32 : i32 to vector<8x128xi32>
    %2 = arith.cmpi sge, %0, %1 : vector<8x128xi32>
    %c96_i32 = arith.constant 96 : i32
    %3 = vector.broadcast %c96_i32 : i32 to vector<8x128xi32>
    %4 = arith.cmpi slt, %0, %3 : vector<8x128xi32>
    %5 = arith.andi %2, %4 : vector<8x128xi1>
    %cst = arith.constant 1.000000e+00 : f32
    %cst_0 = arith.constant 5.000000e-01 : f32
    %6 = vector.broadcast %cst : f32 to vector<8x128xf32>
    %7 = vector.broadcast %cst_0 : f32 to vector<8x128xf32>
    %8 = arith.select %5, %6, %7 : vector<8x128xi1>, vector<8x128xf32>
    %cst_1 = arith.constant 0.000000e+00 : f32
    %cst_2 = arith.constant 5.000000e-01 : f32
    %9 = vector.broadcast %cst_1 : f32 to vector<8x128xf32>
    %10 = vector.broadcast %cst_2 : f32 to vector<8x128xf32>
    %11 = arith.select %5, %9, %10 : vector<8x128xi1>, vector<8x128xf32>
    %c0 = arith.constant 0 : index
    %c0_3 = arith.constant 0 : index
    %12 = vector.load %arg1[%c0, %c0_3] : memref<312x128xf32, #tpu.memory_space<vmem>>, vector<64x128xf32>
    %13 = arith.truncf %12 : vector<64x128xf32> to vector<64x128xbf16>
    %c64 = arith.constant 64 : index
    %c0_4 = arith.constant 0 : index
    %14 = vector.load %arg1[%c64, %c0_4] : memref<312x128xf32, #tpu.memory_space<vmem>>, vector<32x128xf32>
    %15 = arith.truncf %14 : vector<32x128xf32> to vector<32x128xbf16>
    %c96 = arith.constant 96 : index
    %c0_5 = arith.constant 0 : index
    %16 = vector.load %arg1[%c96, %c0_5] : memref<312x128xf32, #tpu.memory_space<vmem>>, vector<1x128xf32>
    %c0_6 = arith.constant 0 : index
    %c0_7 = arith.constant 0 : index
    %17 = vector.load %arg0[%c0_6, %c0_7] : memref<64x64xf32, #tpu.memory_space<vmem>>, vector<64x64xf32>
    %18 = arith.truncf %17 : vector<64x64xf32> to vector<64x64xbf16>
    %cst_8 = arith.constant dense<0.000000e+00> : vector<64x128xf32>
    %19 = tpu.matmul %18, %13, %cst_8 {dimension_numbers = #tpu.dot_dimension_numbers<[1], [0], [0], [1], [0, 0, 1, 1], [], []>} : vector<64x64xbf16>, vector<64x128xbf16>, vector<64x128xf32> -> vector<64x128xf32>
    %20 = vector.broadcast %16 : vector<1x128xf32> to vector<64x128xf32>
    %21 = arith.addf %19, %20 : vector<64x128xf32>
    %c0_9 = arith.constant 0 : index
    %c0_10 = arith.constant 0 : index
    %22 = vector.load %arg3[%c0_9, %c0_10] : memref<64x128xf32, #tpu.memory_space<vmem>>, vector<64x128xf32>
    tpu.vector_store %arg3[%c0_9, %c0_10], %21 {strides = array<i32>} : memref<64x128xf32, #tpu.memory_space<vmem>>, vector<64x128xf32>,
    %cst_11 = arith.constant 0.000000e+00 : f32
    %23 = vector.broadcast %cst_11 : f32 to vector<8x32xf32>
    %cst_12 = arith.constant 0.000000e+00 : f32
    %24 = vector.broadcast %cst_12 : f32 to vector<8x32xf32>
    %c0_13 = arith.constant 0 : index
    %c0_14 = arith.constant 0 : index
    %25 = vector.load %arg3[%c0_13, %c0_14] : memref<64x128xf32, #tpu.memory_space<vmem>>, vector<8x128xf32>
    %26 = arith.truncf %23 : vector<8x32xf32> to vector<8x32xbf16>
    %cst_15 = arith.constant dense<0.000000e+00> : vector<8x128xf32>
    %27 = tpu.matmul %26, %15, %cst_15 {dimension_numbers = #tpu.dot_dimension_numbers<[1], [0], [0], [1], [0, 0, 1, 1], [], []>} : vector<8x32xbf16>, vector<32x128xbf16>, vector<8x128xf32> -> vector<8x128xf32>
    %28 = arith.addf %25, %27 : vector<8x128xf32>
    %29 = arith.mulf %28, %8 : vector<8x128xf32>
    %30 = math.tanh %29 : vector<8x128xf32>
    %31 = arith.mulf %30, %8 : vector<8x128xf32>
    %32 = arith.addf %31, %11 : vector<8x128xf32>
    %33 = vector.extract_strided_slice %32 {offsets = [0, 0], sizes = [8, 32], strides = [1, 1]} : vector<8x128xf32> to vector<8x32xf32>
    %34 = vector.extract_strided_slice %32 {offsets = [0, 32], sizes = [8, 32], strides = [1, 1]} : vector<8x128xf32> to vector<8x32xf32>
    %35 = vector.extract_strided_slice %32 {offsets = [0, 64], sizes = [8, 32], strides = [1, 1]} : vector<8x128xf32> to vector<8x32xf32>
    %36 = vector.extract_strided_slice %32 {offsets = [0, 96], sizes = [8, 32], strides = [1, 1]} : vector<8x128xf32> to vector<8x32xf32>
    %37 = arith.mulf %34, %24 : vector<8x32xf32>
    %38 = arith.mulf %33, %35 : vector<8x32xf32>
    %39 = arith.addf %37, %38 : vector<8x32xf32>
    %40 = math.tanh %39 : vector<8x32xf32>
    %41 = arith.mulf %36, %40 : vector<8x32xf32>
    %c0_16 = arith.constant 0 : index
    %c0_17 = arith.constant 0 : index
    %42 = vector.load %arg4[%c0_16, %c0_17] : memref<64x32xf32, #tpu.memory_space<vmem>>, vector<8x32xf32>
    tpu.vector_store %arg4[%c0_16, %c0_17], %41 {strides = array<i32>} : memref<64x32xf32, #tpu.memory_space<vmem>>, vector<8x32xf32>,
    %c8 = arith.constant 8 : index
    %c0_18 = arith.constant 0 : index
    %43 = vector.load %arg3[%c8, %c0_18] : memref<64x128xf32, #tpu.memory_space<vmem>>, vector<8x128xf32>
    %44 = arith.truncf %41 : vector<8x32xf32> to vector<8x32xbf16>
    %cst_19 = arith.constant dense<0.000000e+00> : vector<8x128xf32>
    %45 = tpu.matmul %44, %15, %cst_19 {dimension_numbers = #tpu.dot_dimension_numbers<[1], [0], [0], [1], [0, 0, 1, 1], [], []>} : vector<8x32xbf16>, vector<32x128xbf16>, vector<8x128xf32> -> vector<8x128xf32>
    %46 = arith.addf %43, %45 : vector<8x128xf32>
    %47 = arith.mulf %46, %8 : vector<8x128xf32>
    %48 = math.tanh %47 : vector<8x128xf32>
    %49 = arith.mulf %48, %8 : vector<8x128xf32>
    %50 = arith.addf %49, %11 : vector<8x128xf32>
    %51 = vector.extract_strided_slice %50 {offsets = [0, 0], sizes = [8, 32], strides = [1, 1]} : vector<8x128xf32> to vector<8x32xf32>
    %52 = vector.extract_strided_slice %50 {offsets = [0, 32], sizes = [8, 32], strides = [1, 1]} : vector<8x128xf32> to vector<8x32xf32>
    %53 = vector.extract_strided_slice %50 {offsets = [0, 64], sizes = [8, 32], strides = [1, 1]} : vector<8x128xf32> to vector<8x32xf32>
    %54 = vector.extract_strided_slice %50 {offsets = [0, 96], sizes = [8, 32], strides = [1, 1]} : vector<8x128xf32> to vector<8x32xf32>
    %55 = arith.mulf %52, %39 : vector<8x32xf32>
    %56 = arith.mulf %51, %53 : vector<8x32xf32>
    %57 = arith.addf %55, %56 : vector<8x32xf32>
    %58 = math.tanh %57 : vector<8x32xf32>
    %59 = arith.mulf %54, %58 : vector<8x32xf32>
    %c8_20 = arith.constant 8 : index
    %c0_21 = arith.constant 0 : index
    %60 = vector.load %arg4[%c8_20, %c0_21] : memref<64x32xf32, #tpu.memory_space<vmem>>, vector<8x32xf32>
    tpu.vector_store %arg4[%c8_20, %c0_21], %59 {strides = array<i32>} : memref<64x32xf32, #tpu.memory_space<vmem>>, vector<8x32xf32>,
    %c16 = arith.constant 16 : index
    %c0_22 = arith.constant 0 : index
    %61 = vector.load %arg3[%c16, %c0_22] : memref<64x128xf32, #tpu.memory_space<vmem>>, vector<8x128xf32>
    %62 = arith.truncf %59 : vector<8x32xf32> to vector<8x32xbf16>
    %cst_23 = arith.constant dense<0.000000e+00> : vector<8x128xf32>
    %63 = tpu.matmul %62, %15, %cst_23 {dimension_numbers = #tpu.dot_dimension_numbers<[1], [0], [0], [1], [0, 0, 1, 1], [], []>} : vector<8x32xbf16>, vector<32x128xbf16>, vector<8x128xf32> -> vector<8x128xf32>
    %64 = arith.addf %61, %63 : vector<8x128xf32>
    %65 = arith.mulf %64, %8 : vector<8x128xf32>
    %66 = math.tanh %65 : vector<8x128xf32>
    %67 = arith.mulf %66, %8 : vector<8x128xf32>
    %68 = arith.addf %67, %11 : vector<8x128xf32>
    %69 = vector.extract_strided_slice %68 {offsets = [0, 0], sizes = [8, 32], strides = [1, 1]} : vector<8x128xf32> to vector<8x32xf32>
    %70 = vector.extract_strided_slice %68 {offsets = [0, 32], sizes = [8, 32], strides = [1, 1]} : vector<8x128xf32> to vector<8x32xf32>
    %71 = vector.extract_strided_slice %68 {offsets = [0, 64], sizes = [8, 32], strides = [1, 1]} : vector<8x128xf32> to vector<8x32xf32>
    %72 = vector.extract_strided_slice %68 {offsets = [0, 96], sizes = [8, 32], strides = [1, 1]} : vector<8x128xf32> to vector<8x32xf32>
    %73 = arith.mulf %70, %57 : vector<8x32xf32>
    %74 = arith.mulf %69, %71 : vector<8x32xf32>
    %75 = arith.addf %73, %74 : vector<8x32xf32>
    %76 = math.tanh %75 : vector<8x32xf32>
    %77 = arith.mulf %72, %76 : vector<8x32xf32>
    %c16_24 = arith.constant 16 : index
    %c0_25 = arith.constant 0 : index
    %78 = vector.load %arg4[%c16_24, %c0_25] : memref<64x32xf32, #tpu.memory_space<vmem>>, vector<8x32xf32>
    tpu.vector_store %arg4[%c16_24, %c0_25], %77 {strides = array<i32>} : memref<64x32xf32, #tpu.memory_space<vmem>>, vector<8x32xf32>,
    %c24 = arith.constant 24 : index
    %c0_26 = arith.constant 0 : index
    %79 = vector.load %arg3[%c24, %c0_26] : memref<64x128xf32, #tpu.memory_space<vmem>>, vector<8x128xf32>
    %80 = arith.truncf %77 : vector<8x32xf32> to vector<8x32xbf16>
    %cst_27 = arith.constant dense<0.000000e+00> : vector<8x128xf32>
    %81 = tpu.matmul %80, %15, %cst_27 {dimension_numbers = #tpu.dot_dimension_numbers<[1], [0], [0], [1], [0, 0, 1, 1], [], []>} : vector<8x32xbf16>, vector<32x128xbf16>, vector<8x128xf32> -> vector<8x128xf32>
    %82 = arith.addf %79, %81 : vector<8x128xf32>
    %83 = arith.mulf %82, %8 : vector<8x128xf32>
    %84 = math.tanh %83 : vector<8x128xf32>
    %85 = arith.mulf %84, %8 : vector<8x128xf32>
    %86 = arith.addf %85, %11 : vector<8x128xf32>
    %87 = vector.extract_strided_slice %86 {offsets = [0, 0], sizes = [8, 32], strides = [1, 1]} : vector<8x128xf32> to vector<8x32xf32>
    %88 = vector.extract_strided_slice %86 {offsets = [0, 32], sizes = [8, 32], strides = [1, 1]} : vector<8x128xf32> to vector<8x32xf32>
    %89 = vector.extract_strided_slice %86 {offsets = [0, 64], sizes = [8, 32], strides = [1, 1]} : vector<8x128xf32> to vector<8x32xf32>
    %90 = vector.extract_strided_slice %86 {offsets = [0, 96], sizes = [8, 32], strides = [1, 1]} : vector<8x128xf32> to vector<8x32xf32>
    %91 = arith.mulf %88, %75 : vector<8x32xf32>
    %92 = arith.mulf %87, %89 : vector<8x32xf32>
    %93 = arith.addf %91, %92 : vector<8x32xf32>
    %94 = math.tanh %93 : vector<8x32xf32>
    %95 = arith.mulf %90, %94 : vector<8x32xf32>
    %c24_28 = arith.constant 24 : index
    %c0_29 = arith.constant 0 : index
    %96 = vector.load %arg4[%c24_28, %c0_29] : memref<64x32xf32, #tpu.memory_space<vmem>>, vector<8x32xf32>
    tpu.vector_store %arg4[%c24_28, %c0_29], %95 {strides = array<i32>} : memref<64x32xf32, #tpu.memory_space<vmem>>, vector<8x32xf32>,
    %c32 = arith.constant 32 : index
    %c0_30 = arith.constant 0 : index
    %97 = vector.load %arg3[%c32, %c0_30] : memref<64x128xf32, #tpu.memory_space<vmem>>, vector<8x128xf32>
    %98 = arith.truncf %95 : vector<8x32xf32> to vector<8x32xbf16>
    %cst_31 = arith.constant dense<0.000000e+00> : vector<8x128xf32>
    %99 = tpu.matmul %98, %15, %cst_31 {dimension_numbers = #tpu.dot_dimension_numbers<[1], [0], [0], [1], [0, 0, 1, 1], [], []>} : vector<8x32xbf16>, vector<32x128xbf16>, vector<8x128xf32> -> vector<8x128xf32>
    %100 = arith.addf %97, %99 : vector<8x128xf32>
    %101 = arith.mulf %100, %8 : vector<8x128xf32>
    %102 = math.tanh %101 : vector<8x128xf32>
    %103 = arith.mulf %102, %8 : vector<8x128xf32>
    %104 = arith.addf %103, %11 : vector<8x128xf32>
    %105 = vector.extract_strided_slice %104 {offsets = [0, 0], sizes = [8, 32], strides = [1, 1]} : vector<8x128xf32> to vector<8x32xf32>
    %106 = vector.extract_strided_slice %104 {offsets = [0, 32], sizes = [8, 32], strides = [1, 1]} : vector<8x128xf32> to vector<8x32xf32>
    %107 = vector.extract_strided_slice %104 {offsets = [0, 64], sizes = [8, 32], strides = [1, 1]} : vector<8x128xf32> to vector<8x32xf32>
    %108 = vector.extract_strided_slice %104 {offsets = [0, 96], sizes = [8, 32], strides = [1, 1]} : vector<8x128xf32> to vector<8x32xf32>
    %109 = arith.mulf %106, %93 : vector<8x32xf32>
    %110 = arith.mulf %105, %107 : vector<8x32xf32>
    %111 = arith.addf %109, %110 : vector<8x32xf32>
    %112 = math.tanh %111 : vector<8x32xf32>
    %113 = arith.mulf %108, %112 : vector<8x32xf32>
    %c32_32 = arith.constant 32 : index
    %c0_33 = arith.constant 0 : index
    %114 = vector.load %arg4[%c32_32, %c0_33] : memref<64x32xf32, #tpu.memory_space<vmem>>, vector<8x32xf32>
    tpu.vector_store %arg4[%c32_32, %c0_33], %113 {strides = array<i32>} : memref<64x32xf32, #tpu.memory_space<vmem>>, vector<8x32xf32>,
    %c40 = arith.constant 40 : index
    %c0_34 = arith.constant 0 : index
    %115 = vector.load %arg3[%c40, %c0_34] : memref<64x128xf32, #tpu.memory_space<vmem>>, vector<8x128xf32>
    %116 = arith.truncf %113 : vector<8x32xf32> to vector<8x32xbf16>
    %cst_35 = arith.constant dense<0.000000e+00> : vector<8x128xf32>
    %117 = tpu.matmul %116, %15, %cst_35 {dimension_numbers = #tpu.dot_dimension_numbers<[1], [0], [0], [1], [0, 0, 1, 1], [], []>} : vector<8x32xbf16>, vector<32x128xbf16>, vector<8x128xf32> -> vector<8x128xf32>
    %118 = arith.addf %115, %117 : vector<8x128xf32>
    %119 = arith.mulf %118, %8 : vector<8x128xf32>
    %120 = math.tanh %119 : vector<8x128xf32>
    %121 = arith.mulf %120, %8 : vector<8x128xf32>
    %122 = arith.addf %121, %11 : vector<8x128xf32>
    %123 = vector.extract_strided_slice %122 {offsets = [0, 0], sizes = [8, 32], strides = [1, 1]} : vector<8x128xf32> to vector<8x32xf32>
    %124 = vector.extract_strided_slice %122 {offsets = [0, 32], sizes = [8, 32], strides = [1, 1]} : vector<8x128xf32> to vector<8x32xf32>
    %125 = vector.extract_strided_slice %122 {offsets = [0, 64], sizes = [8, 32], strides = [1, 1]} : vector<8x128xf32> to vector<8x32xf32>
    %126 = vector.extract_strided_slice %122 {offsets = [0, 96], sizes = [8, 32], strides = [1, 1]} : vector<8x128xf32> to vector<8x32xf32>
    %127 = arith.mulf %124, %111 : vector<8x32xf32>
    %128 = arith.mulf %123, %125 : vector<8x32xf32>
    %129 = arith.addf %127, %128 : vector<8x32xf32>
    %130 = math.tanh %129 : vector<8x32xf32>
    %131 = arith.mulf %126, %130 : vector<8x32xf32>
    %c40_36 = arith.constant 40 : index
    %c0_37 = arith.constant 0 : index
    %132 = vector.load %arg4[%c40_36, %c0_37] : memref<64x32xf32, #tpu.memory_space<vmem>>, vector<8x32xf32>
    tpu.vector_store %arg4[%c40_36, %c0_37], %131 {strides = array<i32>} : memref<64x32xf32, #tpu.memory_space<vmem>>, vector<8x32xf32>,
    %c48 = arith.constant 48 : index
    %c0_38 = arith.constant 0 : index
    %133 = vector.load %arg3[%c48, %c0_38] : memref<64x128xf32, #tpu.memory_space<vmem>>, vector<8x128xf32>
    %134 = arith.truncf %131 : vector<8x32xf32> to vector<8x32xbf16>
    %cst_39 = arith.constant dense<0.000000e+00> : vector<8x128xf32>
    %135 = tpu.matmul %134, %15, %cst_39 {dimension_numbers = #tpu.dot_dimension_numbers<[1], [0], [0], [1], [0, 0, 1, 1], [], []>} : vector<8x32xbf16>, vector<32x128xbf16>, vector<8x128xf32> -> vector<8x128xf32>
    %136 = arith.addf %133, %135 : vector<8x128xf32>
    %137 = arith.mulf %136, %8 : vector<8x128xf32>
    %138 = math.tanh %137 : vector<8x128xf32>
    %139 = arith.mulf %138, %8 : vector<8x128xf32>
    %140 = arith.addf %139, %11 : vector<8x128xf32>
    %141 = vector.extract_strided_slice %140 {offsets = [0, 0], sizes = [8, 32], strides = [1, 1]} : vector<8x128xf32> to vector<8x32xf32>
    %142 = vector.extract_strided_slice %140 {offsets = [0, 32], sizes = [8, 32], strides = [1, 1]} : vector<8x128xf32> to vector<8x32xf32>
    %143 = vector.extract_strided_slice %140 {offsets = [0, 64], sizes = [8, 32], strides = [1, 1]} : vector<8x128xf32> to vector<8x32xf32>
    %144 = vector.extract_strided_slice %140 {offsets = [0, 96], sizes = [8, 32], strides = [1, 1]} : vector<8x128xf32> to vector<8x32xf32>
    %145 = arith.mulf %142, %129 : vector<8x32xf32>
    %146 = arith.mulf %141, %143 : vector<8x32xf32>
    %147 = arith.addf %145, %146 : vector<8x32xf32>
    %148 = math.tanh %147 : vector<8x32xf32>
    %149 = arith.mulf %144, %148 : vector<8x32xf32>
    %c48_40 = arith.constant 48 : index
    %c0_41 = arith.constant 0 : index
    %150 = vector.load %arg4[%c48_40, %c0_41] : memref<64x32xf32, #tpu.memory_space<vmem>>, vector<8x32xf32>
    tpu.vector_store %arg4[%c48_40, %c0_41], %149 {strides = array<i32>} : memref<64x32xf32, #tpu.memory_space<vmem>>, vector<8x32xf32>,
    %c56 = arith.constant 56 : index
    %c0_42 = arith.constant 0 : index
    %151 = vector.load %arg3[%c56, %c0_42] : memref<64x128xf32, #tpu.memory_space<vmem>>, vector<8x128xf32>
    %152 = arith.truncf %149 : vector<8x32xf32> to vector<8x32xbf16>
    %cst_43 = arith.constant dense<0.000000e+00> : vector<8x128xf32>
    %153 = tpu.matmul %152, %15, %cst_43 {dimension_numbers = #tpu.dot_dimension_numbers<[1], [0], [0], [1], [0, 0, 1, 1], [], []>} : vector<8x32xbf16>, vector<32x128xbf16>, vector<8x128xf32> -> vector<8x128xf32>
    %154 = arith.addf %151, %153 : vector<8x128xf32>
    %155 = arith.mulf %154, %8 : vector<8x128xf32>
    %156 = math.tanh %155 : vector<8x128xf32>
    %157 = arith.mulf %156, %8 : vector<8x128xf32>
    %158 = arith.addf %157, %11 : vector<8x128xf32>
    %159 = vector.extract_strided_slice %158 {offsets = [0, 0], sizes = [8, 32], strides = [1, 1]} : vector<8x128xf32> to vector<8x32xf32>
    %160 = vector.extract_strided_slice %158 {offsets = [0, 32], sizes = [8, 32], strides = [1, 1]} : vector<8x128xf32> to vector<8x32xf32>
    %161 = vector.extract_strided_slice %158 {offsets = [0, 64], sizes = [8, 32], strides = [1, 1]} : vector<8x128xf32> to vector<8x32xf32>
    %162 = vector.extract_strided_slice %158 {offsets = [0, 96], sizes = [8, 32], strides = [1, 1]} : vector<8x128xf32> to vector<8x32xf32>
    %163 = arith.mulf %160, %147 : vector<8x32xf32>
    %164 = arith.mulf %159, %161 : vector<8x32xf32>
    %165 = arith.addf %163, %164 : vector<8x32xf32>
    %166 = math.tanh %165 : vector<8x32xf32>
    %167 = arith.mulf %162, %166 : vector<8x32xf32>
    %c56_44 = arith.constant 56 : index
    %c0_45 = arith.constant 0 : index
    %168 = vector.load %arg4[%c56_44, %c0_45] : memref<64x32xf32, #tpu.memory_space<vmem>>, vector<8x32xf32>
    tpu.vector_store %arg4[%c56_44, %c0_45], %167 {strides = array<i32>} : memref<64x32xf32, #tpu.memory_space<vmem>>, vector<8x32xf32>,
    %c0_46 = arith.constant 0 : index
    %c0_47 = arith.constant 0 : index
    %c0_48 = arith.constant 0 : index
    %c0_49 = arith.constant 0 : index
    %169 = vector.load %arg2[%c0_46, %c0_47, %c0_48, %c0_49] : memref<2x3x8x32xf32, #tpu.memory_space<vmem>>, vector<1x1x8x32xf32>
    %170 = vector.shape_cast %169 : vector<1x1x8x32xf32> to vector<8x32xf32>
    %171 = vector.shape_cast %167 : vector<8x32xf32> to vector<1x1x8x32xf32>
    tpu.vector_store %arg2[%c0_46, %c0_47, %c0_48, %c0_49], %171 {strides = array<i32>} : memref<2x3x8x32xf32, #tpu.memory_space<vmem>>, vector<1x1x8x32xf32>,
    %c1 = arith.constant 1 : index
    %c0_50 = arith.constant 0 : index
    %c0_51 = arith.constant 0 : index
    %c0_52 = arith.constant 0 : index
    %172 = vector.load %arg2[%c1, %c0_50, %c0_51, %c0_52] : memref<2x3x8x32xf32, #tpu.memory_space<vmem>>, vector<1x1x8x32xf32>
    %173 = vector.shape_cast %172 : vector<1x1x8x32xf32> to vector<8x32xf32>
    %174 = vector.shape_cast %165 : vector<8x32xf32> to vector<1x1x8x32xf32>
    tpu.vector_store %arg2[%c1, %c0_50, %c0_51, %c0_52], %174 {strides = array<i32>} : memref<2x3x8x32xf32, #tpu.memory_space<vmem>>, vector<1x1x8x32xf32>,
    %c104 = arith.constant 104 : index
    %c0_53 = arith.constant 0 : index
    %175 = vector.load %arg1[%c104, %c0_53] : memref<312x128xf32, #tpu.memory_space<vmem>>, vector<32x128xf32>
    %176 = arith.truncf %175 : vector<32x128xf32> to vector<32x128xbf16>
    %c168 = arith.constant 168 : index
    %c0_54 = arith.constant 0 : index
    %177 = vector.load %arg1[%c168, %c0_54] : memref<312x128xf32, #tpu.memory_space<vmem>>, vector<32x128xf32>
    %178 = arith.truncf %177 : vector<32x128xf32> to vector<32x128xbf16>
    %c200 = arith.constant 200 : index
    %c0_55 = arith.constant 0 : index
    %179 = vector.load %arg1[%c200, %c0_55] : memref<312x128xf32, #tpu.memory_space<vmem>>, vector<1x128xf32>
    %c0_56 = arith.constant 0 : index
    %c0_57 = arith.constant 0 : index
    %180 = vector.load %arg4[%c0_56, %c0_57] : memref<64x32xf32, #tpu.memory_space<vmem>>, vector<64x32xf32>
    %181 = arith.truncf %180 : vector<64x32xf32> to vector<64x32xbf16>
    %cst_58 = arith.constant dense<0.000000e+00> : vector<64x128xf32>
    %182 = tpu.matmul %181, %176, %cst_58 {dimension_numbers = #tpu.dot_dimension_numbers<[1], [0], [0], [1], [0, 0, 1, 1], [], []>} : vector<64x32xbf16>, vector<32x128xbf16>, vector<64x128xf32> -> vector<64x128xf32>
    %183 = vector.broadcast %179 : vector<1x128xf32> to vector<64x128xf32>
    %184 = arith.addf %182, %183 : vector<64x128xf32>
    %c0_59 = arith.constant 0 : index
    %c0_60 = arith.constant 0 : index
    %185 = vector.load %arg3[%c0_59, %c0_60] : memref<64x128xf32, #tpu.memory_space<vmem>>, vector<64x128xf32>
    tpu.vector_store %arg3[%c0_59, %c0_60], %184 {strides = array<i32>} : memref<64x128xf32, #tpu.memory_space<vmem>>, vector<64x128xf32>,
    %cst_61 = arith.constant 0.000000e+00 : f32
    %186 = vector.broadcast %cst_61 : f32 to vector<8x32xf32>
    %cst_62 = arith.constant 0.000000e+00 : f32
    %187 = vector.broadcast %cst_62 : f32 to vector<8x32xf32>
    %c0_63 = arith.constant 0 : index
    %c0_64 = arith.constant 0 : index
    %188 = vector.load %arg3[%c0_63, %c0_64] : memref<64x128xf32, #tpu.memory_space<vmem>>, vector<8x128xf32>
    %189 = arith.truncf %186 : vector<8x32xf32> to vector<8x32xbf16>
    %cst_65 = arith.constant dense<0.000000e+00> : vector<8x128xf32>
    %190 = tpu.matmul %189, %178, %cst_65 {dimension_numbers = #tpu.dot_dimension_numbers<[1], [0], [0], [1], [0, 0, 1, 1], [], []>} : vector<8x32xbf16>, vector<32x128xbf16>, vector<8x128xf32> -> vector<8x128xf32>
    %191 = arith.addf %188, %190 : vector<8x128xf32>
    %192 = arith.mulf %191, %8 : vector<8x128xf32>
    %193 = math.tanh %192 : vector<8x128xf32>
    %194 = arith.mulf %193, %8 : vector<8x128xf32>
    %195 = arith.addf %194, %11 : vector<8x128xf32>
    %196 = vector.extract_strided_slice %195 {offsets = [0, 0], sizes = [8, 32], strides = [1, 1]} : vector<8x128xf32> to vector<8x32xf32>
    %197 = vector.extract_strided_slice %195 {offsets = [0, 32], sizes = [8, 32], strides = [1, 1]} : vector<8x128xf32> to vector<8x32xf32>
    %198 = vector.extract_strided_slice %195 {offsets = [0, 64], sizes = [8, 32], strides = [1, 1]} : vector<8x128xf32> to vector<8x32xf32>
    %199 = vector.extract_strided_slice %195 {offsets = [0, 96], sizes = [8, 32], strides = [1, 1]} : vector<8x128xf32> to vector<8x32xf32>
    %200 = arith.mulf %197, %187 : vector<8x32xf32>
    %201 = arith.mulf %196, %198 : vector<8x32xf32>
    %202 = arith.addf %200, %201 : vector<8x32xf32>
    %203 = math.tanh %202 : vector<8x32xf32>
    %204 = arith.mulf %199, %203 : vector<8x32xf32>
    %c0_66 = arith.constant 0 : index
    %c0_67 = arith.constant 0 : index
    %205 = vector.load %arg4[%c0_66, %c0_67] : memref<64x32xf32, #tpu.memory_space<vmem>>, vector<8x32xf32>
    tpu.vector_store %arg4[%c0_66, %c0_67], %204 {strides = array<i32>} : memref<64x32xf32, #tpu.memory_space<vmem>>, vector<8x32xf32>,
    %c8_68 = arith.constant 8 : index
    %c0_69 = arith.constant 0 : index
    %206 = vector.load %arg3[%c8_68, %c0_69] : memref<64x128xf32, #tpu.memory_space<vmem>>, vector<8x128xf32>
    %207 = arith.truncf %204 : vector<8x32xf32> to vector<8x32xbf16>
    %cst_70 = arith.constant dense<0.000000e+00> : vector<8x128xf32>
    %208 = tpu.matmul %207, %178, %cst_70 {dimension_numbers = #tpu.dot_dimension_numbers<[1], [0], [0], [1], [0, 0, 1, 1], [], []>} : vector<8x32xbf16>, vector<32x128xbf16>, vector<8x128xf32> -> vector<8x128xf32>
    %209 = arith.addf %206, %208 : vector<8x128xf32>
    %210 = arith.mulf %209, %8 : vector<8x128xf32>
    %211 = math.tanh %210 : vector<8x128xf32>
    %212 = arith.mulf %211, %8 : vector<8x128xf32>
    %213 = arith.addf %212, %11 : vector<8x128xf32>
    %214 = vector.extract_strided_slice %213 {offsets = [0, 0], sizes = [8, 32], strides = [1, 1]} : vector<8x128xf32> to vector<8x32xf32>
    %215 = vector.extract_strided_slice %213 {offsets = [0, 32], sizes = [8, 32], strides = [1, 1]} : vector<8x128xf32> to vector<8x32xf32>
    %216 = vector.extract_strided_slice %213 {offsets = [0, 64], sizes = [8, 32], strides = [1, 1]} : vector<8x128xf32> to vector<8x32xf32>
    %217 = vector.extract_strided_slice %213 {offsets = [0, 96], sizes = [8, 32], strides = [1, 1]} : vector<8x128xf32> to vector<8x32xf32>
    %218 = arith.mulf %215, %202 : vector<8x32xf32>
    %219 = arith.mulf %214, %216 : vector<8x32xf32>
    %220 = arith.addf %218, %219 : vector<8x32xf32>
    %221 = math.tanh %220 : vector<8x32xf32>
    %222 = arith.mulf %217, %221 : vector<8x32xf32>
    %c8_71 = arith.constant 8 : index
    %c0_72 = arith.constant 0 : index
    %223 = vector.load %arg4[%c8_71, %c0_72] : memref<64x32xf32, #tpu.memory_space<vmem>>, vector<8x32xf32>
    tpu.vector_store %arg4[%c8_71, %c0_72], %222 {strides = array<i32>} : memref<64x32xf32, #tpu.memory_space<vmem>>, vector<8x32xf32>,
    %c16_73 = arith.constant 16 : index
    %c0_74 = arith.constant 0 : index
    %224 = vector.load %arg3[%c16_73, %c0_74] : memref<64x128xf32, #tpu.memory_space<vmem>>, vector<8x128xf32>
    %225 = arith.truncf %222 : vector<8x32xf32> to vector<8x32xbf16>
    %cst_75 = arith.constant dense<0.000000e+00> : vector<8x128xf32>
    %226 = tpu.matmul %225, %178, %cst_75 {dimension_numbers = #tpu.dot_dimension_numbers<[1], [0], [0], [1], [0, 0, 1, 1], [], []>} : vector<8x32xbf16>, vector<32x128xbf16>, vector<8x128xf32> -> vector<8x128xf32>
    %227 = arith.addf %224, %226 : vector<8x128xf32>
    %228 = arith.mulf %227, %8 : vector<8x128xf32>
    %229 = math.tanh %228 : vector<8x128xf32>
    %230 = arith.mulf %229, %8 : vector<8x128xf32>
    %231 = arith.addf %230, %11 : vector<8x128xf32>
    %232 = vector.extract_strided_slice %231 {offsets = [0, 0], sizes = [8, 32], strides = [1, 1]} : vector<8x128xf32> to vector<8x32xf32>
    %233 = vector.extract_strided_slice %231 {offsets = [0, 32], sizes = [8, 32], strides = [1, 1]} : vector<8x128xf32> to vector<8x32xf32>
    %234 = vector.extract_strided_slice %231 {offsets = [0, 64], sizes = [8, 32], strides = [1, 1]} : vector<8x128xf32> to vector<8x32xf32>
    %235 = vector.extract_strided_slice %231 {offsets = [0, 96], sizes = [8, 32], strides = [1, 1]} : vector<8x128xf32> to vector<8x32xf32>
    %236 = arith.mulf %233, %220 : vector<8x32xf32>
    %237 = arith.mulf %232, %234 : vector<8x32xf32>
    %238 = arith.addf %236, %237 : vector<8x32xf32>
    %239 = math.tanh %238 : vector<8x32xf32>
    %240 = arith.mulf %235, %239 : vector<8x32xf32>
    %c16_76 = arith.constant 16 : index
    %c0_77 = arith.constant 0 : index
    %241 = vector.load %arg4[%c16_76, %c0_77] : memref<64x32xf32, #tpu.memory_space<vmem>>, vector<8x32xf32>
    tpu.vector_store %arg4[%c16_76, %c0_77], %240 {strides = array<i32>} : memref<64x32xf32, #tpu.memory_space<vmem>>, vector<8x32xf32>,
    %c24_78 = arith.constant 24 : index
    %c0_79 = arith.constant 0 : index
    %242 = vector.load %arg3[%c24_78, %c0_79] : memref<64x128xf32, #tpu.memory_space<vmem>>, vector<8x128xf32>
    %243 = arith.truncf %240 : vector<8x32xf32> to vector<8x32xbf16>
    %cst_80 = arith.constant dense<0.000000e+00> : vector<8x128xf32>
    %244 = tpu.matmul %243, %178, %cst_80 {dimension_numbers = #tpu.dot_dimension_numbers<[1], [0], [0], [1], [0, 0, 1, 1], [], []>} : vector<8x32xbf16>, vector<32x128xbf16>, vector<8x128xf32> -> vector<8x128xf32>
    %245 = arith.addf %242, %244 : vector<8x128xf32>
    %246 = arith.mulf %245, %8 : vector<8x128xf32>
    %247 = math.tanh %246 : vector<8x128xf32>
    %248 = arith.mulf %247, %8 : vector<8x128xf32>
    %249 = arith.addf %248, %11 : vector<8x128xf32>
    %250 = vector.extract_strided_slice %249 {offsets = [0, 0], sizes = [8, 32], strides = [1, 1]} : vector<8x128xf32> to vector<8x32xf32>
    %251 = vector.extract_strided_slice %249 {offsets = [0, 32], sizes = [8, 32], strides = [1, 1]} : vector<8x128xf32> to vector<8x32xf32>
    %252 = vector.extract_strided_slice %249 {offsets = [0, 64], sizes = [8, 32], strides = [1, 1]} : vector<8x128xf32> to vector<8x32xf32>
    %253 = vector.extract_strided_slice %249 {offsets = [0, 96], sizes = [8, 32], strides = [1, 1]} : vector<8x128xf32> to vector<8x32xf32>
    %254 = arith.mulf %251, %238 : vector<8x32xf32>
    %255 = arith.mulf %250, %252 : vector<8x32xf32>
    %256 = arith.addf %254, %255 : vector<8x32xf32>
    %257 = math.tanh %256 : vector<8x32xf32>
    %258 = arith.mulf %253, %257 : vector<8x32xf32>
    %c24_81 = arith.constant 24 : index
    %c0_82 = arith.constant 0 : index
    %259 = vector.load %arg4[%c24_81, %c0_82] : memref<64x32xf32, #tpu.memory_space<vmem>>, vector<8x32xf32>
    tpu.vector_store %arg4[%c24_81, %c0_82], %258 {strides = array<i32>} : memref<64x32xf32, #tpu.memory_space<vmem>>, vector<8x32xf32>,
    %c32_83 = arith.constant 32 : index
    %c0_84 = arith.constant 0 : index
    %260 = vector.load %arg3[%c32_83, %c0_84] : memref<64x128xf32, #tpu.memory_space<vmem>>, vector<8x128xf32>
    %261 = arith.truncf %258 : vector<8x32xf32> to vector<8x32xbf16>
    %cst_85 = arith.constant dense<0.000000e+00> : vector<8x128xf32>
    %262 = tpu.matmul %261, %178, %cst_85 {dimension_numbers = #tpu.dot_dimension_numbers<[1], [0], [0], [1], [0, 0, 1, 1], [], []>} : vector<8x32xbf16>, vector<32x128xbf16>, vector<8x128xf32> -> vector<8x128xf32>
    %263 = arith.addf %260, %262 : vector<8x128xf32>
    %264 = arith.mulf %263, %8 : vector<8x128xf32>
    %265 = math.tanh %264 : vector<8x128xf32>
    %266 = arith.mulf %265, %8 : vector<8x128xf32>
    %267 = arith.addf %266, %11 : vector<8x128xf32>
    %268 = vector.extract_strided_slice %267 {offsets = [0, 0], sizes = [8, 32], strides = [1, 1]} : vector<8x128xf32> to vector<8x32xf32>
    %269 = vector.extract_strided_slice %267 {offsets = [0, 32], sizes = [8, 32], strides = [1, 1]} : vector<8x128xf32> to vector<8x32xf32>
    %270 = vector.extract_strided_slice %267 {offsets = [0, 64], sizes = [8, 32], strides = [1, 1]} : vector<8x128xf32> to vector<8x32xf32>
    %271 = vector.extract_strided_slice %267 {offsets = [0, 96], sizes = [8, 32], strides = [1, 1]} : vector<8x128xf32> to vector<8x32xf32>
    %272 = arith.mulf %269, %256 : vector<8x32xf32>
    %273 = arith.mulf %268, %270 : vector<8x32xf32>
    %274 = arith.addf %272, %273 : vector<8x32xf32>
    %275 = math.tanh %274 : vector<8x32xf32>
    %276 = arith.mulf %271, %275 : vector<8x32xf32>
    %c32_86 = arith.constant 32 : index
    %c0_87 = arith.constant 0 : index
    %277 = vector.load %arg4[%c32_86, %c0_87] : memref<64x32xf32, #tpu.memory_space<vmem>>, vector<8x32xf32>
    tpu.vector_store %arg4[%c32_86, %c0_87], %276 {strides = array<i32>} : memref<64x32xf32, #tpu.memory_space<vmem>>, vector<8x32xf32>,
    %c40_88 = arith.constant 40 : index
    %c0_89 = arith.constant 0 : index
    %278 = vector.load %arg3[%c40_88, %c0_89] : memref<64x128xf32, #tpu.memory_space<vmem>>, vector<8x128xf32>
    %279 = arith.truncf %276 : vector<8x32xf32> to vector<8x32xbf16>
    %cst_90 = arith.constant dense<0.000000e+00> : vector<8x128xf32>
    %280 = tpu.matmul %279, %178, %cst_90 {dimension_numbers = #tpu.dot_dimension_numbers<[1], [0], [0], [1], [0, 0, 1, 1], [], []>} : vector<8x32xbf16>, vector<32x128xbf16>, vector<8x128xf32> -> vector<8x128xf32>
    %281 = arith.addf %278, %280 : vector<8x128xf32>
    %282 = arith.mulf %281, %8 : vector<8x128xf32>
    %283 = math.tanh %282 : vector<8x128xf32>
    %284 = arith.mulf %283, %8 : vector<8x128xf32>
    %285 = arith.addf %284, %11 : vector<8x128xf32>
    %286 = vector.extract_strided_slice %285 {offsets = [0, 0], sizes = [8, 32], strides = [1, 1]} : vector<8x128xf32> to vector<8x32xf32>
    %287 = vector.extract_strided_slice %285 {offsets = [0, 32], sizes = [8, 32], strides = [1, 1]} : vector<8x128xf32> to vector<8x32xf32>
    %288 = vector.extract_strided_slice %285 {offsets = [0, 64], sizes = [8, 32], strides = [1, 1]} : vector<8x128xf32> to vector<8x32xf32>
    %289 = vector.extract_strided_slice %285 {offsets = [0, 96], sizes = [8, 32], strides = [1, 1]} : vector<8x128xf32> to vector<8x32xf32>
    %290 = arith.mulf %287, %274 : vector<8x32xf32>
    %291 = arith.mulf %286, %288 : vector<8x32xf32>
    %292 = arith.addf %290, %291 : vector<8x32xf32>
    %293 = math.tanh %292 : vector<8x32xf32>
    %294 = arith.mulf %289, %293 : vector<8x32xf32>
    %c40_91 = arith.constant 40 : index
    %c0_92 = arith.constant 0 : index
    %295 = vector.load %arg4[%c40_91, %c0_92] : memref<64x32xf32, #tpu.memory_space<vmem>>, vector<8x32xf32>
    tpu.vector_store %arg4[%c40_91, %c0_92], %294 {strides = array<i32>} : memref<64x32xf32, #tpu.memory_space<vmem>>, vector<8x32xf32>,
    %c48_93 = arith.constant 48 : index
    %c0_94 = arith.constant 0 : index
    %296 = vector.load %arg3[%c48_93, %c0_94] : memref<64x128xf32, #tpu.memory_space<vmem>>, vector<8x128xf32>
    %297 = arith.truncf %294 : vector<8x32xf32> to vector<8x32xbf16>
    %cst_95 = arith.constant dense<0.000000e+00> : vector<8x128xf32>
    %298 = tpu.matmul %297, %178, %cst_95 {dimension_numbers = #tpu.dot_dimension_numbers<[1], [0], [0], [1], [0, 0, 1, 1], [], []>} : vector<8x32xbf16>, vector<32x128xbf16>, vector<8x128xf32> -> vector<8x128xf32>
    %299 = arith.addf %296, %298 : vector<8x128xf32>
    %300 = arith.mulf %299, %8 : vector<8x128xf32>
    %301 = math.tanh %300 : vector<8x128xf32>
    %302 = arith.mulf %301, %8 : vector<8x128xf32>
    %303 = arith.addf %302, %11 : vector<8x128xf32>
    %304 = vector.extract_strided_slice %303 {offsets = [0, 0], sizes = [8, 32], strides = [1, 1]} : vector<8x128xf32> to vector<8x32xf32>
    %305 = vector.extract_strided_slice %303 {offsets = [0, 32], sizes = [8, 32], strides = [1, 1]} : vector<8x128xf32> to vector<8x32xf32>
    %306 = vector.extract_strided_slice %303 {offsets = [0, 64], sizes = [8, 32], strides = [1, 1]} : vector<8x128xf32> to vector<8x32xf32>
    %307 = vector.extract_strided_slice %303 {offsets = [0, 96], sizes = [8, 32], strides = [1, 1]} : vector<8x128xf32> to vector<8x32xf32>
    %308 = arith.mulf %305, %292 : vector<8x32xf32>
    %309 = arith.mulf %304, %306 : vector<8x32xf32>
    %310 = arith.addf %308, %309 : vector<8x32xf32>
    %311 = math.tanh %310 : vector<8x32xf32>
    %312 = arith.mulf %307, %311 : vector<8x32xf32>
    %c48_96 = arith.constant 48 : index
    %c0_97 = arith.constant 0 : index
    %313 = vector.load %arg4[%c48_96, %c0_97] : memref<64x32xf32, #tpu.memory_space<vmem>>, vector<8x32xf32>
    tpu.vector_store %arg4[%c48_96, %c0_97], %312 {strides = array<i32>} : memref<64x32xf32, #tpu.memory_space<vmem>>, vector<8x32xf32>,
    %c56_98 = arith.constant 56 : index
    %c0_99 = arith.constant 0 : index
    %314 = vector.load %arg3[%c56_98, %c0_99] : memref<64x128xf32, #tpu.memory_space<vmem>>, vector<8x128xf32>
    %315 = arith.truncf %312 : vector<8x32xf32> to vector<8x32xbf16>
    %cst_100 = arith.constant dense<0.000000e+00> : vector<8x128xf32>
    %316 = tpu.matmul %315, %178, %cst_100 {dimension_numbers = #tpu.dot_dimension_numbers<[1], [0], [0], [1], [0, 0, 1, 1], [], []>} : vector<8x32xbf16>, vector<32x128xbf16>, vector<8x128xf32> -> vector<8x128xf32>
    %317 = arith.addf %314, %316 : vector<8x128xf32>
    %318 = arith.mulf %317, %8 : vector<8x128xf32>
    %319 = math.tanh %318 : vector<8x128xf32>
    %320 = arith.mulf %319, %8 : vector<8x128xf32>
    %321 = arith.addf %320, %11 : vector<8x128xf32>
    %322 = vector.extract_strided_slice %321 {offsets = [0, 0], sizes = [8, 32], strides = [1, 1]} : vector<8x128xf32> to vector<8x32xf32>
    %323 = vector.extract_strided_slice %321 {offsets = [0, 32], sizes = [8, 32], strides = [1, 1]} : vector<8x128xf32> to vector<8x32xf32>
    %324 = vector.extract_strided_slice %321 {offsets = [0, 64], sizes = [8, 32], strides = [1, 1]} : vector<8x128xf32> to vector<8x32xf32>
    %325 = vector.extract_strided_slice %321 {offsets = [0, 96], sizes = [8, 32], strides = [1, 1]} : vector<8x128xf32> to vector<8x32xf32>
    %326 = arith.mulf %323, %310 : vector<8x32xf32>
    %327 = arith.mulf %322, %324 : vector<8x32xf32>
    %328 = arith.addf %326, %327 : vector<8x32xf32>
    %329 = math.tanh %328 : vector<8x32xf32>
    %330 = arith.mulf %325, %329 : vector<8x32xf32>
    %c56_101 = arith.constant 56 : index
    %c0_102 = arith.constant 0 : index
    %331 = vector.load %arg4[%c56_101, %c0_102] : memref<64x32xf32, #tpu.memory_space<vmem>>, vector<8x32xf32>
    tpu.vector_store %arg4[%c56_101, %c0_102], %330 {strides = array<i32>} : memref<64x32xf32, #tpu.memory_space<vmem>>, vector<8x32xf32>,
    %c0_103 = arith.constant 0 : index
    %c1_104 = arith.constant 1 : index
    %c0_105 = arith.constant 0 : index
    %c0_106 = arith.constant 0 : index
    %332 = vector.load %arg2[%c0_103, %c1_104, %c0_105, %c0_106] : memref<2x3x8x32xf32, #tpu.memory_space<vmem>>, vector<1x1x8x32xf32>
    %333 = vector.shape_cast %332 : vector<1x1x8x32xf32> to vector<8x32xf32>
    %334 = vector.shape_cast %330 : vector<8x32xf32> to vector<1x1x8x32xf32>
    tpu.vector_store %arg2[%c0_103, %c1_104, %c0_105, %c0_106], %334 {strides = array<i32>} : memref<2x3x8x32xf32, #tpu.memory_space<vmem>>, vector<1x1x8x32xf32>,
    %c1_107 = arith.constant 1 : index
    %c1_108 = arith.constant 1 : index
    %c0_109 = arith.constant 0 : index
    %c0_110 = arith.constant 0 : index
    %335 = vector.load %arg2[%c1_107, %c1_108, %c0_109, %c0_110] : memref<2x3x8x32xf32, #tpu.memory_space<vmem>>, vector<1x1x8x32xf32>
    %336 = vector.shape_cast %335 : vector<1x1x8x32xf32> to vector<8x32xf32>
    %337 = vector.shape_cast %328 : vector<8x32xf32> to vector<1x1x8x32xf32>
    tpu.vector_store %arg2[%c1_107, %c1_108, %c0_109, %c0_110], %337 {strides = array<i32>} : memref<2x3x8x32xf32, #tpu.memory_space<vmem>>, vector<1x1x8x32xf32>,
    %c208 = arith.constant 208 : index
    %c0_111 = arith.constant 0 : index
    %338 = vector.load %arg1[%c208, %c0_111] : memref<312x128xf32, #tpu.memory_space<vmem>>, vector<32x128xf32>
    %339 = arith.truncf %338 : vector<32x128xf32> to vector<32x128xbf16>
    %c272 = arith.constant 272 : index
    %c0_112 = arith.constant 0 : index
    %340 = vector.load %arg1[%c272, %c0_112] : memref<312x128xf32, #tpu.memory_space<vmem>>, vector<32x128xf32>
    %341 = arith.truncf %340 : vector<32x128xf32> to vector<32x128xbf16>
    %c304 = arith.constant 304 : index
    %c0_113 = arith.constant 0 : index
    %342 = vector.load %arg1[%c304, %c0_113] : memref<312x128xf32, #tpu.memory_space<vmem>>, vector<1x128xf32>
    %c0_114 = arith.constant 0 : index
    %c0_115 = arith.constant 0 : index
    %343 = vector.load %arg4[%c0_114, %c0_115] : memref<64x32xf32, #tpu.memory_space<vmem>>, vector<64x32xf32>
    %344 = arith.truncf %343 : vector<64x32xf32> to vector<64x32xbf16>
    %cst_116 = arith.constant dense<0.000000e+00> : vector<64x128xf32>
    %345 = tpu.matmul %344, %339, %cst_116 {dimension_numbers = #tpu.dot_dimension_numbers<[1], [0], [0], [1], [0, 0, 1, 1], [], []>} : vector<64x32xbf16>, vector<32x128xbf16>, vector<64x128xf32> -> vector<64x128xf32>
    %346 = vector.broadcast %342 : vector<1x128xf32> to vector<64x128xf32>
    %347 = arith.addf %345, %346 : vector<64x128xf32>
    %c0_117 = arith.constant 0 : index
    %c0_118 = arith.constant 0 : index
    %348 = vector.load %arg3[%c0_117, %c0_118] : memref<64x128xf32, #tpu.memory_space<vmem>>, vector<64x128xf32>
    tpu.vector_store %arg3[%c0_117, %c0_118], %347 {strides = array<i32>} : memref<64x128xf32, #tpu.memory_space<vmem>>, vector<64x128xf32>,
    %cst_119 = arith.constant 0.000000e+00 : f32
    %349 = vector.broadcast %cst_119 : f32 to vector<8x32xf32>
    %cst_120 = arith.constant 0.000000e+00 : f32
    %350 = vector.broadcast %cst_120 : f32 to vector<8x32xf32>
    %c0_121 = arith.constant 0 : index
    %c0_122 = arith.constant 0 : index
    %351 = vector.load %arg3[%c0_121, %c0_122] : memref<64x128xf32, #tpu.memory_space<vmem>>, vector<8x128xf32>
    %352 = arith.truncf %349 : vector<8x32xf32> to vector<8x32xbf16>
    %cst_123 = arith.constant dense<0.000000e+00> : vector<8x128xf32>
    %353 = tpu.matmul %352, %341, %cst_123 {dimension_numbers = #tpu.dot_dimension_numbers<[1], [0], [0], [1], [0, 0, 1, 1], [], []>} : vector<8x32xbf16>, vector<32x128xbf16>, vector<8x128xf32> -> vector<8x128xf32>
    %354 = arith.addf %351, %353 : vector<8x128xf32>
    %355 = arith.mulf %354, %8 : vector<8x128xf32>
    %356 = math.tanh %355 : vector<8x128xf32>
    %357 = arith.mulf %356, %8 : vector<8x128xf32>
    %358 = arith.addf %357, %11 : vector<8x128xf32>
    %359 = vector.extract_strided_slice %358 {offsets = [0, 0], sizes = [8, 32], strides = [1, 1]} : vector<8x128xf32> to vector<8x32xf32>
    %360 = vector.extract_strided_slice %358 {offsets = [0, 32], sizes = [8, 32], strides = [1, 1]} : vector<8x128xf32> to vector<8x32xf32>
    %361 = vector.extract_strided_slice %358 {offsets = [0, 64], sizes = [8, 32], strides = [1, 1]} : vector<8x128xf32> to vector<8x32xf32>
    %362 = vector.extract_strided_slice %358 {offsets = [0, 96], sizes = [8, 32], strides = [1, 1]} : vector<8x128xf32> to vector<8x32xf32>
    %363 = arith.mulf %360, %350 : vector<8x32xf32>
    %364 = arith.mulf %359, %361 : vector<8x32xf32>
    %365 = arith.addf %363, %364 : vector<8x32xf32>
    %366 = math.tanh %365 : vector<8x32xf32>
    %367 = arith.mulf %362, %366 : vector<8x32xf32>
    %c8_124 = arith.constant 8 : index
    %c0_125 = arith.constant 0 : index
    %368 = vector.load %arg3[%c8_124, %c0_125] : memref<64x128xf32, #tpu.memory_space<vmem>>, vector<8x128xf32>
    %369 = arith.truncf %367 : vector<8x32xf32> to vector<8x32xbf16>
    %cst_126 = arith.constant dense<0.000000e+00> : vector<8x128xf32>
    %370 = tpu.matmul %369, %341, %cst_126 {dimension_numbers = #tpu.dot_dimension_numbers<[1], [0], [0], [1], [0, 0, 1, 1], [], []>} : vector<8x32xbf16>, vector<32x128xbf16>, vector<8x128xf32> -> vector<8x128xf32>
    %371 = arith.addf %368, %370 : vector<8x128xf32>
    %372 = arith.mulf %371, %8 : vector<8x128xf32>
    %373 = math.tanh %372 : vector<8x128xf32>
    %374 = arith.mulf %373, %8 : vector<8x128xf32>
    %375 = arith.addf %374, %11 : vector<8x128xf32>
    %376 = vector.extract_strided_slice %375 {offsets = [0, 0], sizes = [8, 32], strides = [1, 1]} : vector<8x128xf32> to vector<8x32xf32>
    %377 = vector.extract_strided_slice %375 {offsets = [0, 32], sizes = [8, 32], strides = [1, 1]} : vector<8x128xf32> to vector<8x32xf32>
    %378 = vector.extract_strided_slice %375 {offsets = [0, 64], sizes = [8, 32], strides = [1, 1]} : vector<8x128xf32> to vector<8x32xf32>
    %379 = vector.extract_strided_slice %375 {offsets = [0, 96], sizes = [8, 32], strides = [1, 1]} : vector<8x128xf32> to vector<8x32xf32>
    %380 = arith.mulf %377, %365 : vector<8x32xf32>
    %381 = arith.mulf %376, %378 : vector<8x32xf32>
    %382 = arith.addf %380, %381 : vector<8x32xf32>
    %383 = math.tanh %382 : vector<8x32xf32>
    %384 = arith.mulf %379, %383 : vector<8x32xf32>
    %c16_127 = arith.constant 16 : index
    %c0_128 = arith.constant 0 : index
    %385 = vector.load %arg3[%c16_127, %c0_128] : memref<64x128xf32, #tpu.memory_space<vmem>>, vector<8x128xf32>
    %386 = arith.truncf %384 : vector<8x32xf32> to vector<8x32xbf16>
    %cst_129 = arith.constant dense<0.000000e+00> : vector<8x128xf32>
    %387 = tpu.matmul %386, %341, %cst_129 {dimension_numbers = #tpu.dot_dimension_numbers<[1], [0], [0], [1], [0, 0, 1, 1], [], []>} : vector<8x32xbf16>, vector<32x128xbf16>, vector<8x128xf32> -> vector<8x128xf32>
    %388 = arith.addf %385, %387 : vector<8x128xf32>
    %389 = arith.mulf %388, %8 : vector<8x128xf32>
    %390 = math.tanh %389 : vector<8x128xf32>
    %391 = arith.mulf %390, %8 : vector<8x128xf32>
    %392 = arith.addf %391, %11 : vector<8x128xf32>
    %393 = vector.extract_strided_slice %392 {offsets = [0, 0], sizes = [8, 32], strides = [1, 1]} : vector<8x128xf32> to vector<8x32xf32>
    %394 = vector.extract_strided_slice %392 {offsets = [0, 32], sizes = [8, 32], strides = [1, 1]} : vector<8x128xf32> to vector<8x32xf32>
    %395 = vector.extract_strided_slice %392 {offsets = [0, 64], sizes = [8, 32], strides = [1, 1]} : vector<8x128xf32> to vector<8x32xf32>
    %396 = vector.extract_strided_slice %392 {offsets = [0, 96], sizes = [8, 32], strides = [1, 1]} : vector<8x128xf32> to vector<8x32xf32>
    %397 = arith.mulf %394, %382 : vector<8x32xf32>
    %398 = arith.mulf %393, %395 : vector<8x32xf32>
    %399 = arith.addf %397, %398 : vector<8x32xf32>
    %400 = math.tanh %399 : vector<8x32xf32>
    %401 = arith.mulf %396, %400 : vector<8x32xf32>
    %c24_130 = arith.constant 24 : index
    %c0_131 = arith.constant 0 : index
    %402 = vector.load %arg3[%c24_130, %c0_131] : memref<64x128xf32, #tpu.memory_space<vmem>>, vector<8x128xf32>
    %403 = arith.truncf %401 : vector<8x32xf32> to vector<8x32xbf16>
    %cst_132 = arith.constant dense<0.000000e+00> : vector<8x128xf32>
    %404 = tpu.matmul %403, %341, %cst_132 {dimension_numbers = #tpu.dot_dimension_numbers<[1], [0], [0], [1], [0, 0, 1, 1], [], []>} : vector<8x32xbf16>, vector<32x128xbf16>, vector<8x128xf32> -> vector<8x128xf32>
    %405 = arith.addf %402, %404 : vector<8x128xf32>
    %406 = arith.mulf %405, %8 : vector<8x128xf32>
    %407 = math.tanh %406 : vector<8x128xf32>
    %408 = arith.mulf %407, %8 : vector<8x128xf32>
    %409 = arith.addf %408, %11 : vector<8x128xf32>
    %410 = vector.extract_strided_slice %409 {offsets = [0, 0], sizes = [8, 32], strides = [1, 1]} : vector<8x128xf32> to vector<8x32xf32>
    %411 = vector.extract_strided_slice %409 {offsets = [0, 32], sizes = [8, 32], strides = [1, 1]} : vector<8x128xf32> to vector<8x32xf32>
    %412 = vector.extract_strided_slice %409 {offsets = [0, 64], sizes = [8, 32], strides = [1, 1]} : vector<8x128xf32> to vector<8x32xf32>
    %413 = vector.extract_strided_slice %409 {offsets = [0, 96], sizes = [8, 32], strides = [1, 1]} : vector<8x128xf32> to vector<8x32xf32>
    %414 = arith.mulf %411, %399 : vector<8x32xf32>
    %415 = arith.mulf %410, %412 : vector<8x32xf32>
    %416 = arith.addf %414, %415 : vector<8x32xf32>
    %417 = math.tanh %416 : vector<8x32xf32>
    %418 = arith.mulf %413, %417 : vector<8x32xf32>
    %c32_133 = arith.constant 32 : index
    %c0_134 = arith.constant 0 : index
    %419 = vector.load %arg3[%c32_133, %c0_134] : memref<64x128xf32, #tpu.memory_space<vmem>>, vector<8x128xf32>
    %420 = arith.truncf %418 : vector<8x32xf32> to vector<8x32xbf16>
    %cst_135 = arith.constant dense<0.000000e+00> : vector<8x128xf32>
    %421 = tpu.matmul %420, %341, %cst_135 {dimension_numbers = #tpu.dot_dimension_numbers<[1], [0], [0], [1], [0, 0, 1, 1], [], []>} : vector<8x32xbf16>, vector<32x128xbf16>, vector<8x128xf32> -> vector<8x128xf32>
    %422 = arith.addf %419, %421 : vector<8x128xf32>
    %423 = arith.mulf %422, %8 : vector<8x128xf32>
    %424 = math.tanh %423 : vector<8x128xf32>
    %425 = arith.mulf %424, %8 : vector<8x128xf32>
    %426 = arith.addf %425, %11 : vector<8x128xf32>
    %427 = vector.extract_strided_slice %426 {offsets = [0, 0], sizes = [8, 32], strides = [1, 1]} : vector<8x128xf32> to vector<8x32xf32>
    %428 = vector.extract_strided_slice %426 {offsets = [0, 32], sizes = [8, 32], strides = [1, 1]} : vector<8x128xf32> to vector<8x32xf32>
    %429 = vector.extract_strided_slice %426 {offsets = [0, 64], sizes = [8, 32], strides = [1, 1]} : vector<8x128xf32> to vector<8x32xf32>
    %430 = vector.extract_strided_slice %426 {offsets = [0, 96], sizes = [8, 32], strides = [1, 1]} : vector<8x128xf32> to vector<8x32xf32>
    %431 = arith.mulf %428, %416 : vector<8x32xf32>
    %432 = arith.mulf %427, %429 : vector<8x32xf32>
    %433 = arith.addf %431, %432 : vector<8x32xf32>
    %434 = math.tanh %433 : vector<8x32xf32>
    %435 = arith.mulf %430, %434 : vector<8x32xf32>
    %c40_136 = arith.constant 40 : index
    %c0_137 = arith.constant 0 : index
    %436 = vector.load %arg3[%c40_136, %c0_137] : memref<64x128xf32, #tpu.memory_space<vmem>>, vector<8x128xf32>
    %437 = arith.truncf %435 : vector<8x32xf32> to vector<8x32xbf16>
    %cst_138 = arith.constant dense<0.000000e+00> : vector<8x128xf32>
    %438 = tpu.matmul %437, %341, %cst_138 {dimension_numbers = #tpu.dot_dimension_numbers<[1], [0], [0], [1], [0, 0, 1, 1], [], []>} : vector<8x32xbf16>, vector<32x128xbf16>, vector<8x128xf32> -> vector<8x128xf32>
    %439 = arith.addf %436, %438 : vector<8x128xf32>
    %440 = arith.mulf %439, %8 : vector<8x128xf32>
    %441 = math.tanh %440 : vector<8x128xf32>
    %442 = arith.mulf %441, %8 : vector<8x128xf32>
    %443 = arith.addf %442, %11 : vector<8x128xf32>
    %444 = vector.extract_strided_slice %443 {offsets = [0, 0], sizes = [8, 32], strides = [1, 1]} : vector<8x128xf32> to vector<8x32xf32>
    %445 = vector.extract_strided_slice %443 {offsets = [0, 32], sizes = [8, 32], strides = [1, 1]} : vector<8x128xf32> to vector<8x32xf32>
    %446 = vector.extract_strided_slice %443 {offsets = [0, 64], sizes = [8, 32], strides = [1, 1]} : vector<8x128xf32> to vector<8x32xf32>
    %447 = vector.extract_strided_slice %443 {offsets = [0, 96], sizes = [8, 32], strides = [1, 1]} : vector<8x128xf32> to vector<8x32xf32>
    %448 = arith.mulf %445, %433 : vector<8x32xf32>
    %449 = arith.mulf %444, %446 : vector<8x32xf32>
    %450 = arith.addf %448, %449 : vector<8x32xf32>
    %451 = math.tanh %450 : vector<8x32xf32>
    %452 = arith.mulf %447, %451 : vector<8x32xf32>
    %c48_139 = arith.constant 48 : index
    %c0_140 = arith.constant 0 : index
    %453 = vector.load %arg3[%c48_139, %c0_140] : memref<64x128xf32, #tpu.memory_space<vmem>>, vector<8x128xf32>
    %454 = arith.truncf %452 : vector<8x32xf32> to vector<8x32xbf16>
    %cst_141 = arith.constant dense<0.000000e+00> : vector<8x128xf32>
    %455 = tpu.matmul %454, %341, %cst_141 {dimension_numbers = #tpu.dot_dimension_numbers<[1], [0], [0], [1], [0, 0, 1, 1], [], []>} : vector<8x32xbf16>, vector<32x128xbf16>, vector<8x128xf32> -> vector<8x128xf32>
    %456 = arith.addf %453, %455 : vector<8x128xf32>
    %457 = arith.mulf %456, %8 : vector<8x128xf32>
    %458 = math.tanh %457 : vector<8x128xf32>
    %459 = arith.mulf %458, %8 : vector<8x128xf32>
    %460 = arith.addf %459, %11 : vector<8x128xf32>
    %461 = vector.extract_strided_slice %460 {offsets = [0, 0], sizes = [8, 32], strides = [1, 1]} : vector<8x128xf32> to vector<8x32xf32>
    %462 = vector.extract_strided_slice %460 {offsets = [0, 32], sizes = [8, 32], strides = [1, 1]} : vector<8x128xf32> to vector<8x32xf32>
    %463 = vector.extract_strided_slice %460 {offsets = [0, 64], sizes = [8, 32], strides = [1, 1]} : vector<8x128xf32> to vector<8x32xf32>
    %464 = vector.extract_strided_slice %460 {offsets = [0, 96], sizes = [8, 32], strides = [1, 1]} : vector<8x128xf32> to vector<8x32xf32>
    %465 = arith.mulf %462, %450 : vector<8x32xf32>
    %466 = arith.mulf %461, %463 : vector<8x32xf32>
    %467 = arith.addf %465, %466 : vector<8x32xf32>
    %468 = math.tanh %467 : vector<8x32xf32>
    %469 = arith.mulf %464, %468 : vector<8x32xf32>
    %c56_142 = arith.constant 56 : index
    %c0_143 = arith.constant 0 : index
    %470 = vector.load %arg3[%c56_142, %c0_143] : memref<64x128xf32, #tpu.memory_space<vmem>>, vector<8x128xf32>
    %471 = arith.truncf %469 : vector<8x32xf32> to vector<8x32xbf16>
    %cst_144 = arith.constant dense<0.000000e+00> : vector<8x128xf32>
    %472 = tpu.matmul %471, %341, %cst_144 {dimension_numbers = #tpu.dot_dimension_numbers<[1], [0], [0], [1], [0, 0, 1, 1], [], []>} : vector<8x32xbf16>, vector<32x128xbf16>, vector<8x128xf32> -> vector<8x128xf32>
    %473 = arith.addf %470, %472 : vector<8x128xf32>
    %474 = arith.mulf %473, %8 : vector<8x128xf32>
    %475 = math.tanh %474 : vector<8x128xf32>
    %476 = arith.mulf %475, %8 : vector<8x128xf32>
    %477 = arith.addf %476, %11 : vector<8x128xf32>
    %478 = vector.extract_strided_slice %477 {offsets = [0, 0], sizes = [8, 32], strides = [1, 1]} : vector<8x128xf32> to vector<8x32xf32>
    %479 = vector.extract_strided_slice %477 {offsets = [0, 32], sizes = [8, 32], strides = [1, 1]} : vector<8x128xf32> to vector<8x32xf32>
    %480 = vector.extract_strided_slice %477 {offsets = [0, 64], sizes = [8, 32], strides = [1, 1]} : vector<8x128xf32> to vector<8x32xf32>
    %481 = vector.extract_strided_slice %477 {offsets = [0, 96], sizes = [8, 32], strides = [1, 1]} : vector<8x128xf32> to vector<8x32xf32>
    %482 = arith.mulf %479, %467 : vector<8x32xf32>
    %483 = arith.mulf %478, %480 : vector<8x32xf32>
    %484 = arith.addf %482, %483 : vector<8x32xf32>
    %485 = math.tanh %484 : vector<8x32xf32>
    %486 = arith.mulf %481, %485 : vector<8x32xf32>
    %c0_145 = arith.constant 0 : index
    %c2 = arith.constant 2 : index
    %c0_146 = arith.constant 0 : index
    %c0_147 = arith.constant 0 : index
    %487 = vector.load %arg2[%c0_145, %c2, %c0_146, %c0_147] : memref<2x3x8x32xf32, #tpu.memory_space<vmem>>, vector<1x1x8x32xf32>
    %488 = vector.shape_cast %487 : vector<1x1x8x32xf32> to vector<8x32xf32>
    %489 = vector.shape_cast %486 : vector<8x32xf32> to vector<1x1x8x32xf32>
    tpu.vector_store %arg2[%c0_145, %c2, %c0_146, %c0_147], %489 {strides = array<i32>} : memref<2x3x8x32xf32, #tpu.memory_space<vmem>>, vector<1x1x8x32xf32>,
    %c1_148 = arith.constant 1 : index
    %c2_149 = arith.constant 2 : index
    %c0_150 = arith.constant 0 : index
    %c0_151 = arith.constant 0 : index
    %490 = vector.load %arg2[%c1_148, %c2_149, %c0_150, %c0_151] : memref<2x3x8x32xf32, #tpu.memory_space<vmem>>, vector<1x1x8x32xf32>
    %491 = vector.shape_cast %490 : vector<1x1x8x32xf32> to vector<8x32xf32>
    %492 = vector.shape_cast %484 : vector<8x32xf32> to vector<1x1x8x32xf32>
    tpu.vector_store %arg2[%c1_148, %c2_149, %c0_150, %c0_151], %492 {strides = array<i32>} : memref<2x3x8x32xf32, #tpu.memory_space<vmem>>, vector<1x1x8x32xf32>,
    return
  }
}

</mosaic_0001>

<llo_original>
// kernel: encoder_forward.1
$region0: #{encoder_forward.1}
  #allocation0 [shape = 'u32[]', space=smem, size = 0x4, offset = 0x4, fixed_abs, tag = 'smem constant byte address 0x4 - core index']
  #allocation1 [shape = 'u32[72,128]{1,0:T(1,128)}', space=vmem, size = 0x9000, scoped, tag = 'internal scratch']
  #allocation2 [shape = 'f32[64,128]{1,0:T(8,128)}', space=vmem, size = 0x8000, scoped, tag = 'scratch operand']
  #allocation3 [shape = 'f32[64,32]{1,0:T(8,128)}', space=vmem, size = 0x8000, scoped, tag = 'scratch operand']
  %s0 = inlined_call_operand.vmem [shape: f32[64,64], index: 0, kind: input, shape index: {}]
  %s1 = inlined_call_operand.vmem [shape: f32[312,128], index: 1, kind: input, shape index: {}]
  %s2 = inlined_call_operand.vmem [shape: f32[2,3,8,32], index: 2, kind: output, shape index: {}]
  %s3 = sld [smem:[#allocation0]]
  $region18: #{encoder_forward.1} parent=0
    _
  %s5 = ssub.s32 1, %s3
  %s6 = scalar_select 0, %s5, %s3
  // Predicated region
  $region2: #{encoder_forward.1} parent=0 // pred_check
    _
  $region3: #{encoder_forward.1} parent=0 // pred_check_branch
    %8 = sbr.rel (0) target = $region5
  $region4: #{encoder_forward.1} parent=0 // pred_region
    _
  $region5: #{encoder_forward.1} parent=0 // pred_fallthru
    _
  // Predicated region
  $region6: #{encoder_forward.1} parent=0 // pred_check
    _
  $region7: #{encoder_forward.1} parent=0 // pred_check_branch
    %10 = sbr.rel (0) target = $region9
  $region8: #{encoder_forward.1} parent=0 // pred_region
    _
  $region9: #{encoder_forward.1} parent=0 // pred_fallthru
    _
  %v12 = vlaneseq
  %v13 = vand.u32 %v12, 127
  %vm14 = vcmp.ge.s32.totalorder %v13, 64
  %vm15 = vcmp.lt.s32.totalorder %v13, 96
  %vm16 = vmand %vm14, %vm15
  %v17 = vsel %vm16, 1.0, 0.5
  %v18 = vsel %vm16, 0.0, 0.5
  %v19 = vld [vmem:[%s1] sm:$0xff]
  %v20 = vld [vmem:[%s1 + $0x8] sm:$0xff]
  %v21 = vld [vmem:[%s1 + $0x10] sm:$0xff]
  %v22 = vld [vmem:[%s1 + $0x18] sm:$0xff]
  %v23 = vld [vmem:[%s1 + $0x20] sm:$0xff]
  %v24 = vld [vmem:[%s1 + $0x28] sm:$0xff]
  %v25 = vld [vmem:[%s1 + $0x30] sm:$0xff]
  %v26 = vld [vmem:[%s1 + $0x38] sm:$0xff]
  %v27 = vpack.c.bf16 %v20, %v19
  %v28 = vpack.c.bf16 %v22, %v21
  %v29 = vpack.c.bf16 %v24, %v23
  %v30 = vpack.c.bf16 %v26, %v25
  %v31 = vld [vmem:[%s1 + $0x40] sm:$0xff]
  %v32 = vld [vmem:[%s1 + $0x48] sm:$0xff]
  %v33 = vld [vmem:[%s1 + $0x50] sm:$0xff]
  %v34 = vld [vmem:[%s1 + $0x58] sm:$0xff]
  %v35 = vpack.c.bf16 %v32, %v31
  %v36 = vpack.c.bf16 %v34, %v33
  %v37 = vld [vmem:[%s1 + $0x60] sm:$0x1]
  %v38 = vld [vmem:[%s0] sm:$0xff]
  %v39 = vld [vmem:[%s0 + $0x8] sm:$0xff]
  %v40 = vld [vmem:[%s0 + $0x10] sm:$0xff]
  %v41 = vld [vmem:[%s0 + $0x18] sm:$0xff]
  %v42 = vld [vmem:[%s0 + $0x20] sm:$0xff]
  %v43 = vld [vmem:[%s0 + $0x28] sm:$0xff]
  %v44 = vld [vmem:[%s0 + $0x30] sm:$0xff]
  %v45 = vld [vmem:[%s0 + $0x38] sm:$0xff]
  %v46 = vpack.c.bf16 %v39, %v38
  %v47 = vpack.c.bf16 %v41, %v40
  %v48 = vpack.c.bf16 %v43, %v42
  %v49 = vpack.c.bf16 %v45, %v44
  %v50 = vperm.slane %v37, 0
  %vm51 = vcmask 523264
  %v53 = vsel %vm51, %v46, 0
  %v56 = vsel %vm51, %v47, 0
  %v59 = vsel %vm51, %v48, 0
  %v62 = vsel %vm51, %v49, 0
  %64 = vmatpush.bf16.msra.mxu0 0
  %65 = vmatpush.bf16.msra.mxu0 0
  %66 = vmatpush.bf16.msra.mxu0 0
  %67 = vmatpush.bf16.msra.mxu0 0
  %68 = vmatpush.bf16.msra.mxu0 %v30
  %69 = vmatpush.bf16.msra.mxu0 %v29
  %70 = vmatpush.bf16.msra.mxu0 %v28
  %71 = vmatpush.bf16.msra.mxu0 %v27
  %72 = vmatmul.bf16.gmra.mxu0 %v53
  %v73 = vpop.f32.mrf.mxu0
  %v74 = vadd.f32 %v50, %v73
  %v75 = vpop.f32.mrf.mxu0
  %v76 = vadd.f32 %v50, %v75
  %77 = vmatmul.bf16.gmra.mxu0 %v56
  %v78 = vpop.f32.mrf.mxu0
  %v79 = vadd.f32 %v50, %v78
  %v80 = vpop.f32.mrf.mxu0
  %v81 = vadd.f32 %v50, %v80
  %82 = vmatmul.bf16.gmra.mxu0 %v59
  %v83 = vpop.f32.mrf.mxu0
  %v84 = vadd.f32 %v50, %v83
  %v85 = vpop.f32.mrf.mxu0
  %v86 = vadd.f32 %v50, %v85
  %87 = vmatmul.bf16.gmra.mxu0 %v62
  %v88 = vpop.f32.mrf.mxu0
  %v89 = vadd.f32 %v50, %v88
  %v90 = vpop.f32.mrf.mxu0
  %v91 = vadd.f32 %v50, %v90
  %92 = vdwg.mxu0
  %93 = vst [vmem:[#allocation2] sm:$0xff] %v74
  %94 = vst [vmem:[#allocation2 + $0x8] sm:$0xff] %v76
  %95 = vst [vmem:[#allocation2 + $0x10] sm:$0xff] %v79
  %96 = vst [vmem:[#allocation2 + $0x18] sm:$0xff] %v81
  %97 = vst [vmem:[#allocation2 + $0x20] sm:$0xff] %v84
  %98 = vst [vmem:[#allocation2 + $0x28] sm:$0xff] %v86
  %99 = vst [vmem:[#allocation2 + $0x30] sm:$0xff] %v89
  %100 = vst [vmem:[#allocation2 + $0x38] sm:$0xff] %v91
  %v101 = vld [vmem:[#allocation2] sm:$0xff]
  %vm102 = vcmask 261120
  %v104 = vsel %vm102, 0, 0
  %106 = vmatpush.bf16.msra.mxu0 0
  %107 = vmatpush.bf16.msra.mxu0 0
  %108 = vmatpush.bf16.msra.mxu0 0
  %109 = vmatpush.bf16.msra.mxu0 0
  %110 = vmatpush.bf16.msra.mxu0 0
  %111 = vmatpush.bf16.msra.mxu0 0
  %112 = vmatpush.bf16.msra.mxu0 %v36
  %113 = vmatpush.bf16.msra.mxu0 %v35
  %114 = vmatmul.bf16.gmra.mxu0 %v104
  %v115 = vpop.f32.mrf.mxu0
  %v116 = vadd.f32 0.0, %v115
  %v117 = vpop.f32.mrf.mxu0
  %118 = vdwg.mxu0
  %v119 = vadd.f32 %v101, %v116
  %v120 = vmul.f32 %v119, %v17
  %v121 = vtanh.pop %v120
  %v122 = vmul.f32 %v121, %v17
  %v123 = vadd.f32 %v122, %v18
  %v124 = vmul.f32 %v123, 0.0
  %126 = vrot.lane.b32.xlu0 %v123, 64
  %v127 = vpop.permute.xlu0 %126
  %v129 = vmul.f32 %v123, %v127
  %131 = vrot.lane.b32.xlu0 %v129, 32
  %v132 = vpop.permute.xlu0 %131
  %v134 = vadd.f32 %v124, %v132
  %v135 = vtanh.pop %v134
  %137 = vrot.lane.b32.xlu0 %v135, 64
  %v138 = vpop.permute.xlu0 %137
  %v140 = vmul.f32 %v123, %v138
  %142 = vrot.lane.b32.xlu0 %v140, 32
  %v143 = vpop.permute.xlu0 %142
  %145 = vst.msk [vmem:[#allocation3] sm:$0xff] %vm102, %v143
  %v146 = vld [vmem:[#allocation2 + $0x8] sm:$0xff]
  %v147 = vpack.c.bf16 %v140, %v140
  %149 = vrot.lane.b32.xlu0 %v147, 32
  %v150 = vpop.permute.xlu0 %149
  %v152 = vsel %vm102, %v150, 0
  %154 = vmatpush.bf16.msra.mxu0 0
  %155 = vmatpush.bf16.msra.mxu0 0
  %156 = vmatpush.bf16.msra.mxu0 0
  %157 = vmatpush.bf16.msra.mxu0 0
  %158 = vmatpush.bf16.msra.mxu0 0
  %159 = vmatpush.bf16.msra.mxu0 0
  %160 = vmatpush.bf16.msra.mxu0 %v36
  %161 = vmatpush.bf16.msra.mxu0 %v35
  %162 = vmatmul.bf16.gmra.mxu0 %v152
  %v163 = vpop.f32.mrf.mxu0
  %v164 = vadd.f32 0.0, %v163
  %v165 = vpop.f32.mrf.mxu0
  %166 = vdwg.mxu0
  %v167 = vadd.f32 %v146, %v164
  %v168 = vmul.f32 %v167, %v17
  %v169 = vtanh.pop %v168
  %v170 = vmul.f32 %v169, %v17
  %v171 = vadd.f32 %v170, %v18
  %v172 = vmul.f32 %v171, %v134
  %174 = vrot.lane.b32.xlu0 %v171, 64
  %v175 = vpop.permute.xlu0 %174
  %v177 = vmul.f32 %v171, %v175
  %179 = vrot.lane.b32.xlu0 %v177, 32
  %v180 = vpop.permute.xlu0 %179
  %v182 = vadd.f32 %v172, %v180
  %v183 = vtanh.pop %v182
  %185 = vrot.lane.b32.xlu0 %v183, 64
  %v186 = vpop.permute.xlu0 %185
  %v188 = vmul.f32 %v171, %v186
  %190 = vrot.lane.b32.xlu0 %v188, 32
  %v191 = vpop.permute.xlu0 %190
  %193 = vst.msk [vmem:[#allocation3 + $0x8] sm:$0xff] %vm102, %v191
  %v194 = vld [vmem:[#allocation2 + $0x10] sm:$0xff]
  %v195 = vpack.c.bf16 %v188, %v188
  %197 = vrot.lane.b32.xlu0 %v195, 32
  %v198 = vpop.permute.xlu0 %197
  %v200 = vsel %vm102, %v198, 0
  %202 = vmatpush.bf16.msra.mxu0 0
  %203 = vmatpush.bf16.msra.mxu0 0
  %204 = vmatpush.bf16.msra.mxu0 0
  %205 = vmatpush.bf16.msra.mxu0 0
  %206 = vmatpush.bf16.msra.mxu0 0
  %207 = vmatpush.bf16.msra.mxu0 0
  %208 = vmatpush.bf16.msra.mxu0 %v36
  %209 = vmatpush.bf16.msra.mxu0 %v35
  %210 = vmatmul.bf16.gmra.mxu0 %v200
  %v211 = vpop.f32.mrf.mxu0
  %v212 = vadd.f32 0.0, %v211
  %v213 = vpop.f32.mrf.mxu0
  %214 = vdwg.mxu0
  %v215 = vadd.f32 %v194, %v212
  %v216 = vmul.f32 %v215, %v17
  %v217 = vtanh.pop %v216
  %v218 = vmul.f32 %v217, %v17
  %v219 = vadd.f32 %v218, %v18
  %v220 = vmul.f32 %v219, %v182
  %222 = vrot.lane.b32.xlu0 %v219, 64
  %v223 = vpop.permute.xlu0 %222
  %v225 = vmul.f32 %v219, %v223
  %227 = vrot.lane.b32.xlu0 %v225, 32
  %v228 = vpop.permute.xlu0 %227
  %v230 = vadd.f32 %v220, %v228
  %v231 = vtanh.pop %v230
  %233 = vrot.lane.b32.xlu0 %v231, 64
  %v234 = vpop.permute.xlu0 %233
  %v236 = vmul.f32 %v219, %v234
  %238 = vrot.lane.b32.xlu0 %v236, 32
  %v239 = vpop.permute.xlu0 %238
  %241 = vst.msk [vmem:[#allocation3 + $0x10] sm:$0xff] %vm102, %v239
  %v242 = vld [vmem:[#allocation2 + $0x18] sm:$0xff]
  %v243 = vpack.c.bf16 %v236, %v236
  %245 = vrot.lane.b32.xlu0 %v243, 32
  %v246 = vpop.permute.xlu0 %245
  %v248 = vsel %vm102, %v246, 0
  %250 = vmatpush.bf16.msra.mxu0 0
  %251 = vmatpush.bf16.msra.mxu0 0
  %252 = vmatpush.bf16.msra.mxu0 0
  %253 = vmatpush.bf16.msra.mxu0 0
  %254 = vmatpush.bf16.msra.mxu0 0
  %255 = vmatpush.bf16.msra.mxu0 0
  %256 = vmatpush.bf16.msra.mxu0 %v36
  %257 = vmatpush.bf16.msra.mxu0 %v35
  %258 = vmatmul.bf16.gmra.mxu0 %v248
  %v259 = vpop.f32.mrf.mxu0
  %v260 = vadd.f32 0.0, %v259
  %v261 = vpop.f32.mrf.mxu0
  %262 = vdwg.mxu0
  %v263 = vadd.f32 %v242, %v260
  %v264 = vmul.f32 %v263, %v17
  %v265 = vtanh.pop %v264
  %v266 = vmul.f32 %v265, %v17
  %v267 = vadd.f32 %v266, %v18
  %v268 = vmul.f32 %v267, %v230
  %270 = vrot.lane.b32.xlu0 %v267, 64
  %v271 = vpop.permute.xlu0 %270
  %v273 = vmul.f32 %v267, %v271
  %275 = vrot.lane.b32.xlu0 %v273, 32
  %v276 = vpop.permute.xlu0 %275
  %v278 = vadd.f32 %v268, %v276
  %v279 = vtanh.pop %v278
  %281 = vrot.lane.b32.xlu0 %v279, 64
  %v282 = vpop.permute.xlu0 %281
  %v284 = vmul.f32 %v267, %v282
  %286 = vrot.lane.b32.xlu0 %v284, 32
  %v287 = vpop.permute.xlu0 %286
  %289 = vst.msk [vmem:[#allocation3 + $0x18] sm:$0xff] %vm102, %v287
  %v290 = vld [vmem:[#allocation2 + $0x20] sm:$0xff]
  %v291 = vpack.c.bf16 %v284, %v284
  %293 = vrot.lane.b32.xlu0 %v291, 32
  %v294 = vpop.permute.xlu0 %293
  %v296 = vsel %vm102, %v294, 0
  %298 = vmatpush.bf16.msra.mxu0 0
  %299 = vmatpush.bf16.msra.mxu0 0
  %300 = vmatpush.bf16.msra.mxu0 0
  %301 = vmatpush.bf16.msra.mxu0 0
  %302 = vmatpush.bf16.msra.mxu0 0
  %303 = vmatpush.bf16.msra.mxu0 0
  %304 = vmatpush.bf16.msra.mxu0 %v36
  %305 = vmatpush.bf16.msra.mxu0 %v35
  %306 = vmatmul.bf16.gmra.mxu0 %v296
  %v307 = vpop.f32.mrf.mxu0
  %v308 = vadd.f32 0.0, %v307
  %v309 = vpop.f32.mrf.mxu0
  %310 = vdwg.mxu0
  %v311 = vadd.f32 %v290, %v308
  %v312 = vmul.f32 %v311, %v17
  %v313 = vtanh.pop %v312
  %v314 = vmul.f32 %v313, %v17
  %v315 = vadd.f32 %v314, %v18
  %v316 = vmul.f32 %v315, %v278
  %318 = vrot.lane.b32.xlu0 %v315, 64
  %v319 = vpop.permute.xlu0 %318
  %v321 = vmul.f32 %v315, %v319
  %323 = vrot.lane.b32.xlu0 %v321, 32
  %v324 = vpop.permute.xlu0 %323
  %v326 = vadd.f32 %v316, %v324
  %v327 = vtanh.pop %v326
  %329 = vrot.lane.b32.xlu0 %v327, 64
  %v330 = vpop.permute.xlu0 %329
  %v332 = vmul.f32 %v315, %v330
  %334 = vrot.lane.b32.xlu0 %v332, 32
  %v335 = vpop.permute.xlu0 %334
  %337 = vst.msk [vmem:[#allocation3 + $0x20] sm:$0xff] %vm102, %v335
  %v338 = vld [vmem:[#allocation2 + $0x28] sm:$0xff]
  %v339 = vpack.c.bf16 %v332, %v332
  %341 = vrot.lane.b32.xlu0 %v339, 32
  %v342 = vpop.permute.xlu0 %341
  %v344 = vsel %vm102, %v342, 0
  %346 = vmatpush.bf16.msra.mxu0 0
  %347 = vmatpush.bf16.msra.mxu0 0
  %348 = vmatpush.bf16.msra.mxu0 0
  %349 = vmatpush.bf16.msra.mxu0 0
  %350 = vmatpush.bf16.msra.mxu0 0
  %351 = vmatpush.bf16.msra.mxu0 0
  %352 = vmatpush.bf16.msra.mxu0 %v36
  %353 = vmatpush.bf16.msra.mxu0 %v35
  %354 = vmatmul.bf16.gmra.mxu0 %v344
  %v355 = vpop.f32.mrf.mxu0
  %v356 = vadd.f32 0.0, %v355
  %v357 = vpop.f32.mrf.mxu0
  %358 = vdwg.mxu0
  %v359 = vadd.f32 %v338, %v356
  %v360 = vmul.f32 %v359, %v17
  %v361 = vtanh.pop %v360
  %v362 = vmul.f32 %v361, %v17
  %v363 = vadd.f32 %v362, %v18
  %v364 = vmul.f32 %v363, %v326
  %366 = vrot.lane.b32.xlu0 %v363, 64
  %v367 = vpop.permute.xlu0 %366
  %v369 = vmul.f32 %v363, %v367
  %371 = vrot.lane.b32.xlu0 %v369, 32
  %v372 = vpop.permute.xlu0 %371
  %v374 = vadd.f32 %v364, %v372
  %v375 = vtanh.pop %v374
  %377 = vrot.lane.b32.xlu0 %v375, 64
  %v378 = vpop.permute.xlu0 %377
  %v380 = vmul.f32 %v363, %v378
  %382 = vrot.lane.b32.xlu0 %v380, 32
  %v383 = vpop.permute.xlu0 %382
  %385 = vst.msk [vmem:[#allocation3 + $0x28] sm:$0xff] %vm102, %v383
  %v386 = vld [vmem:[#allocation2 + $0x30] sm:$0xff]
  %v387 = vpack.c.bf16 %v380, %v380
  %389 = vrot.lane.b32.xlu0 %v387, 32
  %v390 = vpop.permute.xlu0 %389
  %v392 = vsel %vm102, %v390, 0
  %394 = vmatpush.bf16.msra.mxu0 0
  %395 = vmatpush.bf16.msra.mxu0 0
  %396 = vmatpush.bf16.msra.mxu0 0
  %397 = vmatpush.bf16.msra.mxu0 0
  %398 = vmatpush.bf16.msra.mxu0 0
  %399 = vmatpush.bf16.msra.mxu0 0
  %400 = vmatpush.bf16.msra.mxu0 %v36
  %401 = vmatpush.bf16.msra.mxu0 %v35
  %402 = vmatmul.bf16.gmra.mxu0 %v392
  %v403 = vpop.f32.mrf.mxu0
  %v404 = vadd.f32 0.0, %v403
  %v405 = vpop.f32.mrf.mxu0
  %406 = vdwg.mxu0
  %v407 = vadd.f32 %v386, %v404
  %v408 = vmul.f32 %v407, %v17
  %v409 = vtanh.pop %v408
  %v410 = vmul.f32 %v409, %v17
  %v411 = vadd.f32 %v410, %v18
  %v412 = vmul.f32 %v411, %v374
  %414 = vrot.lane.b32.xlu0 %v411, 64
  %v415 = vpop.permute.xlu0 %414
  %v417 = vmul.f32 %v411, %v415
  %419 = vrot.lane.b32.xlu0 %v417, 32
  %v420 = vpop.permute.xlu0 %419
  %v422 = vadd.f32 %v412, %v420
  %v423 = vtanh.pop %v422
  %425 = vrot.lane.b32.xlu0 %v423, 64
  %v426 = vpop.permute.xlu0 %425
  %v428 = vmul.f32 %v411, %v426
  %430 = vrot.lane.b32.xlu0 %v428, 32
  %v431 = vpop.permute.xlu0 %430
  %433 = vst.msk [vmem:[#allocation3 + $0x30] sm:$0xff] %vm102, %v431
  %v434 = vld [vmem:[#allocation2 + $0x38] sm:$0xff]
  %v435 = vpack.c.bf16 %v428, %v428
  %437 = vrot.lane.b32.xlu0 %v435, 32
  %v438 = vpop.permute.xlu0 %437
  %v440 = vsel %vm102, %v438, 0
  %442 = vmatpush.bf16.msra.mxu0 0
  %443 = vmatpush.bf16.msra.mxu0 0
  %444 = vmatpush.bf16.msra.mxu0 0
  %445 = vmatpush.bf16.msra.mxu0 0
  %446 = vmatpush.bf16.msra.mxu0 0
  %447 = vmatpush.bf16.msra.mxu0 0
  %448 = vmatpush.bf16.msra.mxu0 %v36
  %449 = vmatpush.bf16.msra.mxu0 %v35
  %450 = vmatmul.bf16.gmra.mxu0 %v440
  %v451 = vpop.f32.mrf.mxu0
  %v452 = vadd.f32 0.0, %v451
  %v453 = vpop.f32.mrf.mxu0
  %454 = vdwg.mxu0
  %v455 = vadd.f32 %v434, %v452
  %v456 = vmul.f32 %v455, %v17
  %v457 = vtanh.pop %v456
  %v458 = vmul.f32 %v457, %v17
  %v459 = vadd.f32 %v458, %v18
  %v460 = vmul.f32 %v459, %v422
  %462 = vrot.lane.b32.xlu0 %v459, 64
  %v463 = vpop.permute.xlu0 %462
  %v465 = vmul.f32 %v459, %v463
  %467 = vrot.lane.b32.xlu0 %v465, 32
  %v468 = vpop.permute.xlu0 %467
  %v470 = vadd.f32 %v460, %v468
  %v471 = vtanh.pop %v470
  %473 = vrot.lane.b32.xlu0 %v471, 64
  %v474 = vpop.permute.xlu0 %473
  %v476 = vmul.f32 %v459, %v474
  %478 = vrot.lane.b32.xlu0 %v476, 32
  %v479 = vpop.permute.xlu0 %478
  %481 = vst.msk [vmem:[#allocation3 + $0x38] sm:$0xff] %vm102, %v479
  %482 = vst.msk [vmem:[%s2] sm:$0xff] %vm102, %v479
  %484 = vrot.lane.b32.xlu0 %v470, 96
  %v485 = vpop.permute.xlu0 %484
  %s487 = scalar_lea.vmem %s2, 24
  %488 = vst.msk [vmem:[%s487] sm:$0xff] %vm102, %v485
  %v489 = vld [vmem:[%s1 + $0x68] sm:$0xff]
  %v490 = vld [vmem:[%s1 + $0x70] sm:$0xff]
  %v491 = vld [vmem:[%s1 + $0x78] sm:$0xff]
  %v492 = vld [vmem:[%s1 + $0x80] sm:$0xff]
  %v493 = vpack.c.bf16 %v490, %v489
  %v494 = vpack.c.bf16 %v492, %v491
  %v495 = vld [vmem:[%s1 + $0xa8] sm:$0xff]
  %v496 = vld [vmem:[%s1 + $0xb0] sm:$0xff]
  %v497 = vld [vmem:[%s1 + $0xb8] sm:$0xff]
  %v498 = vld [vmem:[%s1 + $0xc0] sm:$0xff]
  %v499 = vpack.c.bf16 %v496, %v495
  %v500 = vpack.c.bf16 %v498, %v497
  %v501 = vld [vmem:[%s1 + $0xc8] sm:$0x1]
  %v502 = vld [vmem:[#allocation3] sm:$0xff]
  %v503 = vld [vmem:[#allocation3 + $0x8] sm:$0xff]
  %v504 = vld [vmem:[#allocation3 + $0x10] sm:$0xff]
  %v505 = vld [vmem:[#allocation3 + $0x18] sm:$0xff]
  %v506 = vld [vmem:[#allocation3 + $0x20] sm:$0xff]
  %v507 = vld [vmem:[#allocation3 + $0x28] sm:$0xff]
  %v508 = vld [vmem:[#allocation3 + $0x30] sm:$0xff]
  %v509 = vld [vmem:[#allocation3 + $0x38] sm:$0xff]
  %v510 = vpack.c.bf16 %v503, %v502
  %v511 = vpack.c.bf16 %v505, %v504
  %v512 = vpack.c.bf16 %v507, %v506
  %v513 = vpack.c.bf16 %v509, %v508
  %v514 = vperm.slane %v501, 0
  %v516 = vsel %vm102, %v510, 0
  %v519 = vsel %vm102, %v511, 0
  %v522 = vsel %vm102, %v512, 0
  %v525 = vsel %vm102, %v513, 0
  %527 = vmatpush.bf16.msra.mxu0 0
  %528 = vmatpush.bf16.msra.mxu0 0
  %529 = vmatpush.bf16.msra.mxu0 0
  %530 = vmatpush.bf16.msra.mxu0 0
  %531 = vmatpush.bf16.msra.mxu0 0
  %532 = vmatpush.bf16.msra.mxu0 0
  %533 = vmatpush.bf16.msra.mxu0 %v494
  %534 = vmatpush.bf16.msra.mxu0 %v493
  %535 = vmatmul.bf16.gmra.mxu0 %v516
  %v536 = vpop.f32.mrf.mxu0
  %v537 = vadd.f32 %v514, %v536
  %v538 = vpop.f32.mrf.mxu0
  %v539 = vadd.f32 %v514, %v538
  %540 = vmatmul.bf16.gmra.mxu0 %v519
  %v541 = vpop.f32.mrf.mxu0
  %v542 = vadd.f32 %v514, %v541
  %v543 = vpop.f32.mrf.mxu0
  %v544 = vadd.f32 %v514, %v543
  %545 = vmatmul.bf16.gmra.mxu0 %v522
  %v546 = vpop.f32.mrf.mxu0
  %v547 = vadd.f32 %v514, %v546
  %v548 = vpop.f32.mrf.mxu0
  %v549 = vadd.f32 %v514, %v548
  %550 = vmatmul.bf16.gmra.mxu0 %v525
  %v551 = vpop.f32.mrf.mxu0
  %v552 = vadd.f32 %v514, %v551
  %v553 = vpop.f32.mrf.mxu0
  %v554 = vadd.f32 %v514, %v553
  %555 = vdwg.mxu0
  %556 = vst [vmem:[#allocation2] sm:$0xff] %v537
  %557 = vst [vmem:[#allocation2 + $0x8] sm:$0xff] %v539
  %558 = vst [vmem:[#allocation2 + $0x10] sm:$0xff] %v542
  %559 = vst [vmem:[#allocation2 + $0x18] sm:$0xff] %v544
  %560 = vst [vmem:[#allocation2 + $0x20] sm:$0xff] %v547
  %561 = vst [vmem:[#allocation2 + $0x28] sm:$0xff] %v549
  %562 = vst [vmem:[#allocation2 + $0x30] sm:$0xff] %v552
  %563 = vst [vmem:[#allocation2 + $0x38] sm:$0xff] %v554
  %v564 = vld [vmem:[#allocation2] sm:$0xff]
  %565 = vmatpush.bf16.msra.mxu0 0
  %566 = vmatpush.bf16.msra.mxu0 0
  %567 = vmatpush.bf16.msra.mxu0 0
  %568 = vmatpush.bf16.msra.mxu0 0
  %569 = vmatpush.bf16.msra.mxu0 0
  %570 = vmatpush.bf16.msra.mxu0 0
  %571 = vmatpush.bf16.msra.mxu0 %v500
  %572 = vmatpush.bf16.msra.mxu0 %v499
  %573 = vmatmul.bf16.gmra.mxu0 %v104
  %v574 = vpop.f32.mrf.mxu0
  %v575 = vadd.f32 0.0, %v574
  %v576 = vpop.f32.mrf.mxu0
  %577 = vdwg.mxu0
  %v578 = vadd.f32 %v564, %v575
  %v579 = vmul.f32 %v578, %v17
  %v580 = vtanh.pop %v579
  %v581 = vmul.f32 %v580, %v17
  %v582 = vadd.f32 %v581, %v18
  %v583 = vmul.f32 %v582, 0.0
  %585 = vrot.lane.b32.xlu0 %v582, 64
  %v586 = vpop.permute.xlu0 %585
  %v588 = vmul.f32 %v582, %v586
  %590 = vrot.lane.b32.xlu0 %v588, 32
  %v591 = vpop.permute.xlu0 %590
  %v593 = vadd.f32 %v583, %v591
  %v594 = vtanh.pop %v593
  %596 = vrot.lane.b32.xlu0 %v594, 64
  %v597 = vpop.permute.xlu0 %596
  %v599 = vmul.f32 %v582, %v597
  %601 = vrot.lane.b32.xlu0 %v599, 32
  %v602 = vpop.permute.xlu0 %601
  %604 = vst.msk [vmem:[#allocation3] sm:$0xff] %vm102, %v602
  %v605 = vld [vmem:[#allocation2 + $0x8] sm:$0xff]
  %v606 = vpack.c.bf16 %v599, %v599
  %608 = vrot.lane.b32.xlu0 %v606, 32
  %v609 = vpop.permute.xlu0 %608
  %v611 = vsel %vm102, %v609, 0
  %613 = vmatpush.bf16.msra.mxu0 0
  %614 = vmatpush.bf16.msra.mxu0 0
  %615 = vmatpush.bf16.msra.mxu0 0
  %616 = vmatpush.bf16.msra.mxu0 0
  %617 = vmatpush.bf16.msra.mxu0 0
  %618 = vmatpush.bf16.msra.mxu0 0
  %619 = vmatpush.bf16.msra.mxu0 %v500
  %620 = vmatpush.bf16.msra.mxu0 %v499
  %621 = vmatmul.bf16.gmra.mxu0 %v611
  %v622 = vpop.f32.mrf.mxu0
  %v623 = vadd.f32 0.0, %v622
  %v624 = vpop.f32.mrf.mxu0
  %625 = vdwg.mxu0
  %v626 = vadd.f32 %v605, %v623
  %v627 = vmul.f32 %v626, %v17
  %v628 = vtanh.pop %v627
  %v629 = vmul.f32 %v628, %v17
  %v630 = vadd.f32 %v629, %v18
  %v631 = vmul.f32 %v630, %v593
  %633 = vrot.lane.b32.xlu0 %v630, 64
  %v634 = vpop.permute.xlu0 %633
  %v636 = vmul.f32 %v630, %v634
  %638 = vrot.lane.b32.xlu0 %v636, 32
  %v639 = vpop.permute.xlu0 %638
  %v641 = vadd.f32 %v631, %v639
  %v642 = vtanh.pop %v641
  %644 = vrot.lane.b32.xlu0 %v642, 64
  %v645 = vpop.permute.xlu0 %644
  %v647 = vmul.f32 %v630, %v645
  %649 = vrot.lane.b32.xlu0 %v647, 32
  %v650 = vpop.permute.xlu0 %649
  %652 = vst.msk [vmem:[#allocation3 + $0x8] sm:$0xff] %vm102, %v650
  %v653 = vld [vmem:[#allocation2 + $0x10] sm:$0xff]
  %v654 = vpack.c.bf16 %v647, %v647
  %656 = vrot.lane.b32.xlu0 %v654, 32
  %v657 = vpop.permute.xlu0 %656
  %v659 = vsel %vm102, %v657, 0
  %661 = vmatpush.bf16.msra.mxu0 0
  %662 = vmatpush.bf16.msra.mxu0 0
  %663 = vmatpush.bf16.msra.mxu0 0
  %664 = vmatpush.bf16.msra.mxu0 0
  %665 = vmatpush.bf16.msra.mxu0 0
  %666 = vmatpush.bf16.msra.mxu0 0
  %667 = vmatpush.bf16.msra.mxu0 %v500
  %668 = vmatpush.bf16.msra.mxu0 %v499
  %669 = vmatmul.bf16.gmra.mxu0 %v659
  %v670 = vpop.f32.mrf.mxu0
  %v671 = vadd.f32 0.0, %v670
  %v672 = vpop.f32.mrf.mxu0
  %673 = vdwg.mxu0
  %v674 = vadd.f32 %v653, %v671
  %v675 = vmul.f32 %v674, %v17
  %v676 = vtanh.pop %v675
  %v677 = vmul.f32 %v676, %v17
  %v678 = vadd.f32 %v677, %v18
  %v679 = vmul.f32 %v678, %v641
  %681 = vrot.lane.b32.xlu0 %v678, 64
  %v682 = vpop.permute.xlu0 %681
  %v684 = vmul.f32 %v678, %v682
  %686 = vrot.lane.b32.xlu0 %v684, 32
  %v687 = vpop.permute.xlu0 %686
  %v689 = vadd.f32 %v679, %v687
  %v690 = vtanh.pop %v689
  %692 = vrot.lane.b32.xlu0 %v690, 64
  %v693 = vpop.permute.xlu0 %692
  %v695 = vmul.f32 %v678, %v693
  %697 = vrot.lane.b32.xlu0 %v695, 32
  %v698 = vpop.permute.xlu0 %697
  %700 = vst.msk [vmem:[#allocation3 + $0x10] sm:$0xff] %vm102, %v698
  %v701 = vld [vmem:[#allocation2 + $0x18] sm:$0xff]
  %v702 = vpack.c.bf16 %v695, %v695
  %704 = vrot.lane.b32.xlu0 %v702, 32
  %v705 = vpop.permute.xlu0 %704
  %v707 = vsel %vm102, %v705, 0
  %709 = vmatpush.bf16.msra.mxu0 0
  %710 = vmatpush.bf16.msra.mxu0 0
  %711 = vmatpush.bf16.msra.mxu0 0
  %712 = vmatpush.bf16.msra.mxu0 0
  %713 = vmatpush.bf16.msra.mxu0 0
  %714 = vmatpush.bf16.msra.mxu0 0
  %715 = vmatpush.bf16.msra.mxu0 %v500
  %716 = vmatpush.bf16.msra.mxu0 %v499
  %717 = vmatmul.bf16.gmra.mxu0 %v707
  %v718 = vpop.f32.mrf.mxu0
  %v719 = vadd.f32 0.0, %v718
  %v720 = vpop.f32.mrf.mxu0
  %721 = vdwg.mxu0
  %v722 = vadd.f32 %v701, %v719
  %v723 = vmul.f32 %v722, %v17
  %v724 = vtanh.pop %v723
  %v725 = vmul.f32 %v724, %v17
  %v726 = vadd.f32 %v725, %v18
  %v727 = vmul.f32 %v726, %v689
  %729 = vrot.lane.b32.xlu0 %v726, 64
  %v730 = vpop.permute.xlu0 %729
  %v732 = vmul.f32 %v726, %v730
  %734 = vrot.lane.b32.xlu0 %v732, 32
  %v735 = vpop.permute.xlu0 %734
  %v737 = vadd.f32 %v727, %v735
  %v738 = vtanh.pop %v737
  %740 = vrot.lane.b32.xlu0 %v738, 64
  %v741 = vpop.permute.xlu0 %740
  %v743 = vmul.f32 %v726, %v741
  %745 = vrot.lane.b32.xlu0 %v743, 32
  %v746 = vpop.permute.xlu0 %745
  %748 = vst.msk [vmem:[#allocation3 + $0x18] sm:$0xff] %vm102, %v746
  %v749 = vld [vmem:[#allocation2 + $0x20] sm:$0xff]
  %v750 = vpack.c.bf16 %v743, %v743
  %752 = vrot.lane.b32.xlu0 %v750, 32
  %v753 = vpop.permute.xlu0 %752
  %v755 = vsel %vm102, %v753, 0
  %757 = vmatpush.bf16.msra.mxu0 0
  %758 = vmatpush.bf16.msra.mxu0 0
  %759 = vmatpush.bf16.msra.mxu0 0
  %760 = vmatpush.bf16.msra.mxu0 0
  %761 = vmatpush.bf16.msra.mxu0 0
  %762 = vmatpush.bf16.msra.mxu0 0
  %763 = vmatpush.bf16.msra.mxu0 %v500
  %764 = vmatpush.bf16.msra.mxu0 %v499
  %765 = vmatmul.bf16.gmra.mxu0 %v755
  %v766 = vpop.f32.mrf.mxu0
  %v767 = vadd.f32 0.0, %v766
  %v768 = vpop.f32.mrf.mxu0
  %769 = vdwg.mxu0
  %v770 = vadd.f32 %v749, %v767
  %v771 = vmul.f32 %v770, %v17
  %v772 = vtanh.pop %v771
  %v773 = vmul.f32 %v772, %v17
  %v774 = vadd.f32 %v773, %v18
  %v775 = vmul.f32 %v774, %v737
  %777 = vrot.lane.b32.xlu0 %v774, 64
  %v778 = vpop.permute.xlu0 %777
  %v780 = vmul.f32 %v774, %v778
  %782 = vrot.lane.b32.xlu0 %v780, 32
  %v783 = vpop.permute.xlu0 %782
  %v785 = vadd.f32 %v775, %v783
  %v786 = vtanh.pop %v785
  %788 = vrot.lane.b32.xlu0 %v786, 64
  %v789 = vpop.permute.xlu0 %788
  %v791 = vmul.f32 %v774, %v789
  %793 = vrot.lane.b32.xlu0 %v791, 32
  %v794 = vpop.permute.xlu0 %793
  %796 = vst.msk [vmem:[#allocation3 + $0x20] sm:$0xff] %vm102, %v794
  %v797 = vld [vmem:[#allocation2 + $0x28] sm:$0xff]
  %v798 = vpack.c.bf16 %v791, %v791
  %800 = vrot.lane.b32.xlu0 %v798, 32
  %v801 = vpop.permute.xlu0 %800
  %v803 = vsel %vm102, %v801, 0
  %805 = vmatpush.bf16.msra.mxu0 0
  %806 = vmatpush.bf16.msra.mxu0 0
  %807 = vmatpush.bf16.msra.mxu0 0
  %808 = vmatpush.bf16.msra.mxu0 0
  %809 = vmatpush.bf16.msra.mxu0 0
  %810 = vmatpush.bf16.msra.mxu0 0
  %811 = vmatpush.bf16.msra.mxu0 %v500
  %812 = vmatpush.bf16.msra.mxu0 %v499
  %813 = vmatmul.bf16.gmra.mxu0 %v803
  %v814 = vpop.f32.mrf.mxu0
  %v815 = vadd.f32 0.0, %v814
  %v816 = vpop.f32.mrf.mxu0
  %817 = vdwg.mxu0
  %v818 = vadd.f32 %v797, %v815
  %v819 = vmul.f32 %v818, %v17
  %v820 = vtanh.pop %v819
  %v821 = vmul.f32 %v820, %v17
  %v822 = vadd.f32 %v821, %v18
  %v823 = vmul.f32 %v822, %v785
  %825 = vrot.lane.b32.xlu0 %v822, 64
  %v826 = vpop.permute.xlu0 %825
  %v828 = vmul.f32 %v822, %v826
  %830 = vrot.lane.b32.xlu0 %v828, 32
  %v831 = vpop.permute.xlu0 %830
  %v833 = vadd.f32 %v823, %v831
  %v834 = vtanh.pop %v833
  %836 = vrot.lane.b32.xlu0 %v834, 64
  %v837 = vpop.permute.xlu0 %836
  %v839 = vmul.f32 %v822, %v837
  %841 = vrot.lane.b32.xlu0 %v839, 32
  %v842 = vpop.permute.xlu0 %841
  %844 = vst.msk [vmem:[#allocation3 + $0x28] sm:$0xff] %vm102, %v842
  %v845 = vld [vmem:[#allocation2 + $0x30] sm:$0xff]
  %v846 = vpack.c.bf16 %v839, %v839
  %848 = vrot.lane.b32.xlu0 %v846, 32
  %v849 = vpop.permute.xlu0 %848
  %v851 = vsel %vm102, %v849, 0
  %853 = vmatpush.bf16.msra.mxu0 0
  %854 = vmatpush.bf16.msra.mxu0 0
  %855 = vmatpush.bf16.msra.mxu0 0
  %856 = vmatpush.bf16.msra.mxu0 0
  %857 = vmatpush.bf16.msra.mxu0 0
  %858 = vmatpush.bf16.msra.mxu0 0
  %859 = vmatpush.bf16.msra.mxu0 %v500
  %860 = vmatpush.bf16.msra.mxu0 %v499
  %861 = vmatmul.bf16.gmra.mxu0 %v851
  %v862 = vpop.f32.mrf.mxu0
  %v863 = vadd.f32 0.0, %v862
  %v864 = vpop.f32.mrf.mxu0
  %865 = vdwg.mxu0
  %v866 = vadd.f32 %v845, %v863
  %v867 = vmul.f32 %v866, %v17
  %v868 = vtanh.pop %v867
  %v869 = vmul.f32 %v868, %v17
  %v870 = vadd.f32 %v869, %v18
  %v871 = vmul.f32 %v870, %v833
  %873 = vrot.lane.b32.xlu0 %v870, 64
  %v874 = vpop.permute.xlu0 %873
  %v876 = vmul.f32 %v870, %v874
  %878 = vrot.lane.b32.xlu0 %v876, 32
  %v879 = vpop.permute.xlu0 %878
  %v881 = vadd.f32 %v871, %v879
  %v882 = vtanh.pop %v881
  %884 = vrot.lane.b32.xlu0 %v882, 64
  %v885 = vpop.permute.xlu0 %884
  %v887 = vmul.f32 %v870, %v885
  %889 = vrot.lane.b32.xlu0 %v887, 32
  %v890 = vpop.permute.xlu0 %889
  %892 = vst.msk [vmem:[#allocation3 + $0x30] sm:$0xff] %vm102, %v890
  %v893 = vld [vmem:[#allocation2 + $0x38] sm:$0xff]
  %v894 = vpack.c.bf16 %v887, %v887
  %896 = vrot.lane.b32.xlu0 %v894, 32
  %v897 = vpop.permute.xlu0 %896
  %v899 = vsel %vm102, %v897, 0
  %901 = vmatpush.bf16.msra.mxu0 0
  %902 = vmatpush.bf16.msra.mxu0 0
  %903 = vmatpush.bf16.msra.mxu0 0
  %904 = vmatpush.bf16.msra.mxu0 0
  %905 = vmatpush.bf16.msra.mxu0 0
  %906 = vmatpush.bf16.msra.mxu0 0
  %907 = vmatpush.bf16.msra.mxu0 %v500
  %908 = vmatpush.bf16.msra.mxu0 %v499
  %909 = vmatmul.bf16.gmra.mxu0 %v899
  %v910 = vpop.f32.mrf.mxu0
  %v911 = vadd.f32 0.0, %v910
  %v912 = vpop.f32.mrf.mxu0
  %913 = vdwg.mxu0
  %v914 = vadd.f32 %v893, %v911
  %v915 = vmul.f32 %v914, %v17
  %v916 = vtanh.pop %v915
  %v917 = vmul.f32 %v916, %v17
  %v918 = vadd.f32 %v917, %v18
  %v919 = vmul.f32 %v918, %v881
  %921 = vrot.lane.b32.xlu0 %v918, 64
  %v922 = vpop.permute.xlu0 %921
  %v924 = vmul.f32 %v918, %v922
  %926 = vrot.lane.b32.xlu0 %v924, 32
  %v927 = vpop.permute.xlu0 %926
  %v929 = vadd.f32 %v919, %v927
  %v930 = vtanh.pop %v929
  %932 = vrot.lane.b32.xlu0 %v930, 64
  %v933 = vpop.permute.xlu0 %932
  %v935 = vmul.f32 %v918, %v933
  %937 = vrot.lane.b32.xlu0 %v935, 32
  %v938 = vpop.permute.xlu0 %937
  %940 = vst.msk [vmem:[#allocation3 + $0x38] sm:$0xff] %vm102, %v938
  %s941 = scalar_lea.vmem %s2, 8
  %942 = vst.msk [vmem:[%s941] sm:$0xff] %vm102, %v938
  %944 = vrot.lane.b32.xlu0 %v929, 96
  %v945 = vpop.permute.xlu0 %944
  %s947 = scalar_lea.vmem %s2, 32
  %948 = vst.msk [vmem:[%s947] sm:$0xff] %vm102, %v945
  %v949 = vld [vmem:[%s1 + $0xd0] sm:$0xff]
  %v950 = vld [vmem:[%s1 + $0xd8] sm:$0xff]
  %v951 = vld [vmem:[%s1 + $0xe0] sm:$0xff]
  %v952 = vld [vmem:[%s1 + $0xe8] sm:$0xff]
  %v953 = vpack.c.bf16 %v950, %v949
  %v954 = vpack.c.bf16 %v952, %v951
  %v955 = vld [vmem:[%s1 + $0x110] sm:$0xff]
  %v956 = vld [vmem:[%s1 + $0x118] sm:$0xff]
  %v957 = vld [vmem:[%s1 + $0x120] sm:$0xff]
  %v958 = vld [vmem:[%s1 + $0x128] sm:$0xff]
  %v959 = vpack.c.bf16 %v956, %v955
  %v960 = vpack.c.bf16 %v958, %v957
  %v961 = vld [vmem:[%s1 + $0x130] sm:$0x1]
  %v962 = vld [vmem:[#allocation3] sm:$0xff]
  %v963 = vld [vmem:[#allocation3 + $0x8] sm:$0xff]
  %v964 = vld [vmem:[#allocation3 + $0x10] sm:$0xff]
  %v965 = vld [vmem:[#allocation3 + $0x18] sm:$0xff]
  %v966 = vld [vmem:[#allocation3 + $0x20] sm:$0xff]
  %v967 = vld [vmem:[#allocation3 + $0x28] sm:$0xff]
  %v968 = vld [vmem:[#allocation3 + $0x30] sm:$0xff]
  %v969 = vld [vmem:[#allocation3 + $0x38] sm:$0xff]
  %v970 = vpack.c.bf16 %v963, %v962
  %v971 = vpack.c.bf16 %v965, %v964
  %v972 = vpack.c.bf16 %v967, %v966
  %v973 = vpack.c.bf16 %v969, %v968
  %v974 = vperm.slane %v961, 0
  %v976 = vsel %vm102, %v970, 0
  %v979 = vsel %vm102, %v971, 0
  %v982 = vsel %vm102, %v972, 0
  %v985 = vsel %vm102, %v973, 0
  %987 = vmatpush.bf16.msra.mxu0 0
  %988 = vmatpush.bf16.msra.mxu0 0
  %989 = vmatpush.bf16.msra.mxu0 0
  %990 = vmatpush.bf16.msra.mxu0 0
  %991 = vmatpush.bf16.msra.mxu0 0
  %992 = vmatpush.bf16.msra.mxu0 0
  %993 = vmatpush.bf16.msra.mxu0 %v954
  %994 = vmatpush.bf16.msra.mxu0 %v953
  %995 = vmatmul.bf16.gmra.mxu0 %v976
  %v996 = vpop.f32.mrf.mxu0
  %v997 = vadd.f32 %v974, %v996
  %v998 = vpop.f32.mrf.mxu0
  %v999 = vadd.f32 %v974, %v998
  %1000 = vmatmul.bf16.gmra.mxu0 %v979
  %v1001 = vpop.f32.mrf.mxu0
  %v1002 = vadd.f32 %v974, %v1001
  %v1003 = vpop.f32.mrf.mxu0
  %v1004 = vadd.f32 %v974, %v1003
  %1005 = vmatmul.bf16.gmra.mxu0 %v982
  %v1006 = vpop.f32.mrf.mxu0
  %v1007 = vadd.f32 %v974, %v1006
  %v1008 = vpop.f32.mrf.mxu0
  %v1009 = vadd.f32 %v974, %v1008
  %1010 = vmatmul.bf16.gmra.mxu0 %v985
  %v1011 = vpop.f32.mrf.mxu0
  %v1012 = vadd.f32 %v974, %v1011
  %v1013 = vpop.f32.mrf.mxu0
  %v1014 = vadd.f32 %v974, %v1013
  %1015 = vdwg.mxu0
  %1016 = vst [vmem:[#allocation2] sm:$0xff] %v997
  %1017 = vst [vmem:[#allocation2 + $0x8] sm:$0xff] %v999
  %1018 = vst [vmem:[#allocation2 + $0x10] sm:$0xff] %v1002
  %1019 = vst [vmem:[#allocation2 + $0x18] sm:$0xff] %v1004
  %1020 = vst [vmem:[#allocation2 + $0x20] sm:$0xff] %v1007
  %1021 = vst [vmem:[#allocation2 + $0x28] sm:$0xff] %v1009
  %1022 = vst [vmem:[#allocation2 + $0x30] sm:$0xff] %v1012
  %1023 = vst [vmem:[#allocation2 + $0x38] sm:$0xff] %v1014
  %v1024 = vld [vmem:[#allocation2] sm:$0xff]
  %1025 = vmatpush.bf16.msra.mxu0 0
  %1026 = vmatpush.bf16.msra.mxu0 0
  %1027 = vmatpush.bf16.msra.mxu0 0
  %1028 = vmatpush.bf16.msra.mxu0 0
  %1029 = vmatpush.bf16.msra.mxu0 0
  %1030 = vmatpush.bf16.msra.mxu0 0
  %1031 = vmatpush.bf16.msra.mxu0 %v960
  %1032 = vmatpush.bf16.msra.mxu0 %v959
  %1033 = vmatmul.bf16.gmra.mxu0 %v104
  %v1034 = vpop.f32.mrf.mxu0
  %v1035 = vadd.f32 0.0, %v1034
  %v1036 = vpop.f32.mrf.mxu0
  %1037 = vdwg.mxu0
  %v1038 = vadd.f32 %v1024, %v1035
  %v1039 = vmul.f32 %v1038, %v17
  %v1040 = vtanh.pop %v1039
  %v1041 = vmul.f32 %v1040, %v17
  %v1042 = vadd.f32 %v1041, %v18
  %v1043 = vmul.f32 %v1042, 0.0
  %1045 = vrot.lane.b32.xlu0 %v1042, 64
  %v1046 = vpop.permute.xlu0 %1045
  %v1048 = vmul.f32 %v1042, %v1046
  %1050 = vrot.lane.b32.xlu0 %v1048, 32
  %v1051 = vpop.permute.xlu0 %1050
  %v1053 = vadd.f32 %v1043, %v1051
  %v1054 = vtanh.pop %v1053
  %1056 = vrot.lane.b32.xlu0 %v1054, 64
  %v1057 = vpop.permute.xlu0 %1056
  %v1059 = vmul.f32 %v1042, %v1057
  %v1060 = vld [vmem:[#allocation2 + $0x8] sm:$0xff]
  %v1061 = vpack.c.bf16 %v1059, %v1059
  %1063 = vrot.lane.b32.xlu0 %v1061, 32
  %v1064 = vpop.permute.xlu0 %1063
  %v1066 = vsel %vm102, %v1064, 0
  %1068 = vmatpush.bf16.msra.mxu0 0
  %1069 = vmatpush.bf16.msra.mxu0 0
  %1070 = vmatpush.bf16.msra.mxu0 0
  %1071 = vmatpush.bf16.msra.mxu0 0
  %1072 = vmatpush.bf16.msra.mxu0 0
  %1073 = vmatpush.bf16.msra.mxu0 0
  %1074 = vmatpush.bf16.msra.mxu0 %v960
  %1075 = vmatpush.bf16.msra.mxu0 %v959
  %1076 = vmatmul.bf16.gmra.mxu0 %v1066
  %v1077 = vpop.f32.mrf.mxu0
  %v1078 = vadd.f32 0.0, %v1077
  %v1079 = vpop.f32.mrf.mxu0
  %1080 = vdwg.mxu0
  %v1081 = vadd.f32 %v1060, %v1078
  %v1082 = vmul.f32 %v1081, %v17
  %v1083 = vtanh.pop %v1082
  %v1084 = vmul.f32 %v1083, %v17
  %v1085 = vadd.f32 %v1084, %v18
  %v1086 = vmul.f32 %v1085, %v1053
  %1088 = vrot.lane.b32.xlu0 %v1085, 64
  %v1089 = vpop.permute.xlu0 %1088
  %v1091 = vmul.f32 %v1085, %v1089
  %1093 = vrot.lane.b32.xlu0 %v1091, 32
  %v1094 = vpop.permute.xlu0 %1093
  %v1096 = vadd.f32 %v1086, %v1094
  %v1097 = vtanh.pop %v1096
  %1099 = vrot.lane.b32.xlu0 %v1097, 64
  %v1100 = vpop.permute.xlu0 %1099
  %v1102 = vmul.f32 %v1085, %v1100
  %v1103 = vld [vmem:[#allocation2 + $0x10] sm:$0xff]
  %v1104 = vpack.c.bf16 %v1102, %v1102
  %1106 = vrot.lane.b32.xlu0 %v1104, 32
  %v1107 = vpop.permute.xlu0 %1106
  %v1109 = vsel %vm102, %v1107, 0
  %1111 = vmatpush.bf16.msra.mxu0 0
  %1112 = vmatpush.bf16.msra.mxu0 0
  %1113 = vmatpush.bf16.msra.mxu0 0
  %1114 = vmatpush.bf16.msra.mxu0 0
  %1115 = vmatpush.bf16.msra.mxu0 0
  %1116 = vmatpush.bf16.msra.mxu0 0
  %1117 = vmatpush.bf16.msra.mxu0 %v960
  %1118 = vmatpush.bf16.msra.mxu0 %v959
  %1119 = vmatmul.bf16.gmra.mxu0 %v1109
  %v1120 = vpop.f32.mrf.mxu0
  %v1121 = vadd.f32 0.0, %v1120
  %v1122 = vpop.f32.mrf.mxu0
  %1123 = vdwg.mxu0
  %v1124 = vadd.f32 %v1103, %v1121
  %v1125 = vmul.f32 %v1124, %v17
  %v1126 = vtanh.pop %v1125
  %v1127 = vmul.f32 %v1126, %v17
  %v1128 = vadd.f32 %v1127, %v18
  %v1129 = vmul.f32 %v1128, %v1096
  %1131 = vrot.lane.b32.xlu0 %v1128, 64
  %v1132 = vpop.permute.xlu0 %1131
  %v1134 = vmul.f32 %v1128, %v1132
  %1136 = vrot.lane.b32.xlu0 %v1134, 32
  %v1137 = vpop.permute.xlu0 %1136
  %v1139 = vadd.f32 %v1129, %v1137
  %v1140 = vtanh.pop %v1139
  %1142 = vrot.lane.b32.xlu0 %v1140, 64
  %v1143 = vpop.permute.xlu0 %1142
  %v1145 = vmul.f32 %v1128, %v1143
  %v1146 = vld [vmem:[#allocation2 + $0x18] sm:$0xff]
  %v1147 = vpack.c.bf16 %v1145, %v1145
  %1149 = vrot.lane.b32.xlu0 %v1147, 32
  %v1150 = vpop.permute.xlu0 %1149
  %v1152 = vsel %vm102, %v1150, 0
  %1154 = vmatpush.bf16.msra.mxu0 0
  %1155 = vmatpush.bf16.msra.mxu0 0
  %1156 = vmatpush.bf16.msra.mxu0 0
  %1157 = vmatpush.bf16.msra.mxu0 0
  %1158 = vmatpush.bf16.msra.mxu0 0
  %1159 = vmatpush.bf16.msra.mxu0 0
  %1160 = vmatpush.bf16.msra.mxu0 %v960
  %1161 = vmatpush.bf16.msra.mxu0 %v959
  %1162 = vmatmul.bf16.gmra.mxu0 %v1152
  %v1163 = vpop.f32.mrf.mxu0
  %v1164 = vadd.f32 0.0, %v1163
  %v1165 = vpop.f32.mrf.mxu0
  %1166 = vdwg.mxu0
  %v1167 = vadd.f32 %v1146, %v1164
  %v1168 = vmul.f32 %v1167, %v17
  %v1169 = vtanh.pop %v1168
  %v1170 = vmul.f32 %v1169, %v17
  %v1171 = vadd.f32 %v1170, %v18
  %v1172 = vmul.f32 %v1171, %v1139
  %1174 = vrot.lane.b32.xlu0 %v1171, 64
  %v1175 = vpop.permute.xlu0 %1174
  %v1177 = vmul.f32 %v1171, %v1175
  %1179 = vrot.lane.b32.xlu0 %v1177, 32
  %v1180 = vpop.permute.xlu0 %1179
  %v1182 = vadd.f32 %v1172, %v1180
  %v1183 = vtanh.pop %v1182
  %1185 = vrot.lane.b32.xlu0 %v1183, 64
  %v1186 = vpop.permute.xlu0 %1185
  %v1188 = vmul.f32 %v1171, %v1186
  %v1189 = vld [vmem:[#allocation2 + $0x20] sm:$0xff]
  %v1190 = vpack.c.bf16 %v1188, %v1188
  %1192 = vrot.lane.b32.xlu0 %v1190, 32
  %v1193 = vpop.permute.xlu0 %1192
  %v1195 = vsel %vm102, %v1193, 0
  %1197 = vmatpush.bf16.msra.mxu0 0
  %1198 = vmatpush.bf16.msra.mxu0 0
  %1199 = vmatpush.bf16.msra.mxu0 0
  %1200 = vmatpush.bf16.msra.mxu0 0
  %1201 = vmatpush.bf16.msra.mxu0 0
  %1202 = vmatpush.bf16.msra.mxu0 0
  %1203 = vmatpush.bf16.msra.mxu0 %v960
  %1204 = vmatpush.bf16.msra.mxu0 %v959
  %1205 = vmatmul.bf16.gmra.mxu0 %v1195
  %v1206 = vpop.f32.mrf.mxu0
  %v1207 = vadd.f32 0.0, %v1206
  %v1208 = vpop.f32.mrf.mxu0
  %1209 = vdwg.mxu0
  %v1210 = vadd.f32 %v1189, %v1207
  %v1211 = vmul.f32 %v1210, %v17
  %v1212 = vtanh.pop %v1211
  %v1213 = vmul.f32 %v1212, %v17
  %v1214 = vadd.f32 %v1213, %v18
  %v1215 = vmul.f32 %v1214, %v1182
  %1217 = vrot.lane.b32.xlu0 %v1214, 64
  %v1218 = vpop.permute.xlu0 %1217
  %v1220 = vmul.f32 %v1214, %v1218
  %1222 = vrot.lane.b32.xlu0 %v1220, 32
  %v1223 = vpop.permute.xlu0 %1222
  %v1225 = vadd.f32 %v1215, %v1223
  %v1226 = vtanh.pop %v1225
  %1228 = vrot.lane.b32.xlu0 %v1226, 64
  %v1229 = vpop.permute.xlu0 %1228
  %v1231 = vmul.f32 %v1214, %v1229
  %v1232 = vld [vmem:[#allocation2 + $0x28] sm:$0xff]
  %v1233 = vpack.c.bf16 %v1231, %v1231
  %1235 = vrot.lane.b32.xlu0 %v1233, 32
  %v1236 = vpop.permute.xlu0 %1235
  %v1238 = vsel %vm102, %v1236, 0
  %1240 = vmatpush.bf16.msra.mxu0 0
  %1241 = vmatpush.bf16.msra.mxu0 0
  %1242 = vmatpush.bf16.msra.mxu0 0
  %1243 = vmatpush.bf16.msra.mxu0 0
  %1244 = vmatpush.bf16.msra.mxu0 0
  %1245 = vmatpush.bf16.msra.mxu0 0
  %1246 = vmatpush.bf16.msra.mxu0 %v960
  %1247 = vmatpush.bf16.msra.mxu0 %v959
  %1248 = vmatmul.bf16.gmra.mxu0 %v1238
  %v1249 = vpop.f32.mrf.mxu0
  %v1250 = vadd.f32 0.0, %v1249
  %v1251 = vpop.f32.mrf.mxu0
  %1252 = vdwg.mxu0
  %v1253 = vadd.f32 %v1232, %v1250
  %v1254 = vmul.f32 %v1253, %v17
  %v1255 = vtanh.pop %v1254
  %v1256 = vmul.f32 %v1255, %v17
  %v1257 = vadd.f32 %v1256, %v18
  %v1258 = vmul.f32 %v1257, %v1225
  %1260 = vrot.lane.b32.xlu0 %v1257, 64
  %v1261 = vpop.permute.xlu0 %1260
  %v1263 = vmul.f32 %v1257, %v1261
  %1265 = vrot.lane.b32.xlu0 %v1263, 32
  %v1266 = vpop.permute.xlu0 %1265
  %v1268 = vadd.f32 %v1258, %v1266
  %v1269 = vtanh.pop %v1268
  %1271 = vrot.lane.b32.xlu0 %v1269, 64
  %v1272 = vpop.permute.xlu0 %1271
  %v1274 = vmul.f32 %v1257, %v1272
  %v1275 = vld [vmem:[#allocation2 + $0x30] sm:$0xff]
  %v1276 = vpack.c.bf16 %v1274, %v1274
  %1278 = vrot.lane.b32.xlu0 %v1276, 32
  %v1279 = vpop.permute.xlu0 %1278
  %v1281 = vsel %vm102, %v1279, 0
  %1283 = vmatpush.bf16.msra.mxu0 0
  %1284 = vmatpush.bf16.msra.mxu0 0
  %1285 = vmatpush.bf16.msra.mxu0 0
  %1286 = vmatpush.bf16.msra.mxu0 0
  %1287 = vmatpush.bf16.msra.mxu0 0
  %1288 = vmatpush.bf16.msra.mxu0 0
  %1289 = vmatpush.bf16.msra.mxu0 %v960
  %1290 = vmatpush.bf16.msra.mxu0 %v959
  %1291 = vmatmul.bf16.gmra.mxu0 %v1281
  %v1292 = vpop.f32.mrf.mxu0
  %v1293 = vadd.f32 0.0, %v1292
  %v1294 = vpop.f32.mrf.mxu0
  %1295 = vdwg.mxu0
  %v1296 = vadd.f32 %v1275, %v1293
  %v1297 = vmul.f32 %v1296, %v17
  %v1298 = vtanh.pop %v1297
  %v1299 = vmul.f32 %v1298, %v17
  %v1300 = vadd.f32 %v1299, %v18
  %v1301 = vmul.f32 %v1300, %v1268
  %1303 = vrot.lane.b32.xlu0 %v1300, 64
  %v1304 = vpop.permute.xlu0 %1303
  %v1306 = vmul.f32 %v1300, %v1304
  %1308 = vrot.lane.b32.xlu0 %v1306, 32
  %v1309 = vpop.permute.xlu0 %1308
  %v1311 = vadd.f32 %v1301, %v1309
  %v1312 = vtanh.pop %v1311
  %1314 = vrot.lane.b32.xlu0 %v1312, 64
  %v1315 = vpop.permute.xlu0 %1314
  %v1317 = vmul.f32 %v1300, %v1315
  %v1318 = vld [vmem:[#allocation2 + $0x38] sm:$0xff]
  %v1319 = vpack.c.bf16 %v1317, %v1317
  %1321 = vrot.lane.b32.xlu0 %v1319, 32
  %v1322 = vpop.permute.xlu0 %1321
  %v1324 = vsel %vm102, %v1322, 0
  %1326 = vmatpush.bf16.msra.mxu0 0
  %1327 = vmatpush.bf16.msra.mxu0 0
  %1328 = vmatpush.bf16.msra.mxu0 0
  %1329 = vmatpush.bf16.msra.mxu0 0
  %1330 = vmatpush.bf16.msra.mxu0 0
  %1331 = vmatpush.bf16.msra.mxu0 0
  %1332 = vmatpush.bf16.msra.mxu0 %v960
  %1333 = vmatpush.bf16.msra.mxu0 %v959
  %1334 = vmatmul.bf16.gmra.mxu0 %v1324
  %v1335 = vpop.f32.mrf.mxu0
  %v1336 = vadd.f32 0.0, %v1335
  %v1337 = vpop.f32.mrf.mxu0
  %1338 = vdwg.mxu0
  %v1339 = vadd.f32 %v1318, %v1336
  %v1340 = vmul.f32 %v1339, %v17
  %v1341 = vtanh.pop %v1340
  %v1342 = vmul.f32 %v1341, %v17
  %v1343 = vadd.f32 %v1342, %v18
  %v1344 = vmul.f32 %v1343, %v1311
  %1346 = vrot.lane.b32.xlu0 %v1343, 64
  %v1347 = vpop.permute.xlu0 %1346
  %v1349 = vmul.f32 %v1343, %v1347
  %1351 = vrot.lane.b32.xlu0 %v1349, 32
  %v1352 = vpop.permute.xlu0 %1351
  %v1354 = vadd.f32 %v1344, %v1352
  %v1355 = vtanh.pop %v1354
  %1357 = vrot.lane.b32.xlu0 %v1355, 64
  %v1358 = vpop.permute.xlu0 %1357
  %v1360 = vmul.f32 %v1343, %v1358
  %1362 = vrot.lane.b32.xlu0 %v1360, 32
  %v1363 = vpop.permute.xlu0 %1362
  %s1365 = scalar_lea.vmem %s2, 16
  %1366 = vst.msk [vmem:[%s1365] sm:$0xff] %vm102, %v1363
  %1368 = vrot.lane.b32.xlu0 %v1354, 96
  %v1369 = vpop.permute.xlu0 %1368
  %s1371 = scalar_lea.vmem %s2, 40
  %1372 = vst.msk [vmem:[%s1371] sm:$0xff] %vm102, %v1369
  // Predicated region
  $region10: #{encoder_forward.1} parent=0 // pred_check
    _
  $region11: #{encoder_forward.1} parent=0 // pred_check_branch
    %1374 = sbr.rel (0) target = $region13
  $region12: #{encoder_forward.1} parent=0 // pred_region
    _
  $region13: #{encoder_forward.1} parent=0 // pred_fallthru
    _
  // Predicated region
  $region14: #{encoder_forward.1} parent=0 // pred_check
    _
  $region15: #{encoder_forward.1} parent=0 // pred_check_branch
    %1376 = sbr.rel (0) target = $region17
  $region16: #{encoder_forward.1} parent=0 // pred_region
    _
  $region17: #{encoder_forward.1} parent=0 // pred_fallthru
    _

</llo_original>
